<compile_context>
chip_gen: v7x
topology: tpu7x:2x2x1
jax: 0.10.0
libtpu: 0.0.40
codegen_flags: <defaults>
</compile_context>

<pallas_src>
import numpy as np
import jax
import jax.numpy as jnp
from jax.experimental import pallas as pl
from jax.experimental.pallas import tpu as pltpu

LN_EPS = 1e-5  # PyTorch nn.LayerNorm default


def _layer_norm(x, g, b):
    # centred two-pass LayerNorm (matches torch reference numerics)
    mu = jnp.mean(x, axis=-1, keepdims=True)
    xc = x - mu
    var = jnp.mean(xc * xc, axis=-1, keepdims=True)
    return xc * jax.lax.rsqrt(var + LN_EPS) * g + b


def _make_decoder_kernel(h, S, D, mm_dtype):
    def _mm(a, b):
        # cast operands at the dot boundary, accumulate in f32 on the MXU
        return jnp.dot(a.astype(mm_dtype), b.astype(mm_dtype),
                       preferred_element_type=jnp.float32)

    def _bmm(eq, a, b):
        return jnp.einsum(eq, a.astype(mm_dtype), b.astype(mm_dtype),
                          preferred_element_type=jnp.float32)

    def kernel(x_ref, bias_ref, wq_ref, wk_ref, wv_ref, wo_ref,
               ln1g_ref, ln1b_ref, ln2g_ref, ln2b_ref,
               w1_ref, b1_ref, w2_ref, b2_ref,
               wout_ref, bout_ref, o_ref, x_scr):
        l = pl.program_id(1)

        @pl.when(l == 0)
        def _():
            x_scr[...] = x_ref[0].astype(jnp.float32)          # (S, D)

        x = x_scr[...]                                         # (S, D) f32

        # ---- pre-LN masked multi-head attention (heads batched) ----
        nx = _layer_norm(x, ln1g_ref[0], ln1b_ref[0])
        nx_h = jnp.broadcast_to(nx[None], (h, S, D))           # head-batched view
        q = _bmm('hsd,hdq->hsq', nx_h, wq_ref[0])              # 1/sqrt(dq) folded in Wq
        k = _bmm('hsd,hdk->hsk', nx_h, wk_ref[0])
        v = _bmm('hsd,hdv->hsv', nx_h, wv_ref[0])
        s = _bmm('hqe,hke->hqk', q, k) + bias_ref[...][None]   # additive causal bias
        s = s - jnp.max(s, axis=-1, keepdims=True)
        p = jnp.exp(s)
        denom = jnp.sum(p, axis=-1, keepdims=True)
        r = pl.reciprocal(denom, approx=True)                  # EUP slot
        r = r * (2.0 - denom * r)                              # one NR step -> exact-ish
        p = p * r
        o = _bmm('hqk,hkv->hqv', p, v)                         # (h, S, d_v)
        y = _bmm('hqv,hvd->hqd', o, wo_ref[0])                 # per-head out-proj
        x = x + jnp.sum(y, axis=0)                             # combine heads (no concat)

        # ---- pre-LN feed-forward ----
        nx2 = _layer_norm(x, ln2g_ref[0], ln2b_ref[0])
        hid = jnp.maximum(_mm(nx2, w1_ref[0]) + b1_ref[0], 0.0)
        x = x + _mm(hid, w2_ref[0]) + b2_ref[0]
        x_scr[...] = x

        # ---- final vocab projection (lane-padded), last layer only ----
        @pl.when(l == pl.num_programs(1) - 1)
        def _():
            o_ref[0] = (_mm(x, wout_ref[...]) + bout_ref[...]).astype(o_ref.dtype)

    return kernel


def decoder_forward(dec_inp, pe, params, d_model, matmul_dtype=jnp.float32):
    B, S = dec_inp.shape
    blocks = params["blocks"]
    L = len(blocks)
    h, D, d_q = blocks[0]["wq"].shape
    d_k = blocks[0]["wk"].shape[2]
    d_v = blocks[0]["wv"].shape[2]
    d_mid = blocks[0]["w1"].shape[1]
    T = params["l1_w"].shape[1]
    T_pad = ((T + 127) // 128) * 128

    # --- one-time weight prep (glue): stack per layer, fold attention scale,
    #     split Wo by head, lane-pad the vocab projection ---
    wq = jnp.stack([b["wq"] for b in blocks]) / np.sqrt(d_q)       # (L,h,D,dq)
    wk = jnp.stack([b["wk"] for b in blocks])                      # (L,h,D,dk)
    wv = jnp.stack([b["wv"] for b in blocks])                      # (L,h,D,dv)
    wo = jnp.stack([b["wo"].reshape(h, d_v, D) for b in blocks])   # (L,h,dv,D)
    ln1g = jnp.stack([b["ln1_g"] for b in blocks])                 # (L,1,D)
    ln1b = jnp.stack([b["ln1_b"] for b in blocks])
    ln2g = jnp.stack([b["ln2_g"] for b in blocks])
    ln2b = jnp.stack([b["ln2_b"] for b in blocks])
    w1 = jnp.stack([b["w1"] for b in blocks])                      # (L,D,d_mid)
    b1 = jnp.stack([b["b1"] for b in blocks])                      # (L,1,d_mid)
    w2 = jnp.stack([b["w2"] for b in blocks])                      # (L,d_mid,D)
    b2 = jnp.stack([b["b2"] for b in blocks])                      # (L,1,D)
    wout = jnp.pad(params["l1_w"], ((0, 0), (0, T_pad - T)))       # (D,T_pad)
    bout = jnp.pad(params["l1_b"], ((0, 0), (0, T_pad - T)))       # (1,T_pad)

    # (S,S) additive causal bias, built once, shared by all heads/layers/batches
    causal = jnp.tril(jnp.ones((S, S), dtype=bool))
    bias = jnp.where(causal, 0.0, -1e30).astype(jnp.float32)

    # embedding gather + scale + positional encoding: plain-JAX glue
    # TODO(synk): embedding lookup (data-dependent gather) stays outside the kernel.
    x = params["embedding"][dec_inp] * np.sqrt(d_model) + pe       # (B,S,D)
    x = x.astype(jnp.float32)

    kernel = _make_decoder_kernel(h, S, D, matmul_dtype)

    def layer_spec(shape):
        n = len(shape) - 1
        return pl.BlockSpec((1,) + tuple(shape[1:]),
                            lambda b, l, _n=n: (l,) + (0,) * _n)

    def const_spec(shape):
        n = len(shape)
        return pl.BlockSpec(tuple(shape), lambda b, l, _n=n: (0,) * _n)

    out = pl.pallas_call(
        kernel,
        out_shape=jax.ShapeDtypeStruct((B, S, T_pad), jnp.float32),
        grid=(B, L),
        in_specs=[
            pl.BlockSpec((1, S, D), lambda b, l: (b, 0, 0)),       # x
            const_spec((S, S)),                                    # causal bias
            layer_spec((L, h, D, d_q)),                            # wq
            layer_spec((L, h, D, d_k)),                            # wk
            layer_spec((L, h, D, d_v)),                            # wv
            layer_spec((L, h, d_v, D)),                            # wo
            layer_spec((L, 1, D)), layer_spec((L, 1, D)),          # ln1 g/b
            layer_spec((L, 1, D)), layer_spec((L, 1, D)),          # ln2 g/b
            layer_spec((L, D, d_mid)), layer_spec((L, 1, d_mid)),  # w1/b1
            layer_spec((L, d_mid, D)), layer_spec((L, 1, D)),      # w2/b2
            const_spec((D, T_pad)), const_spec((1, T_pad)),        # wout/bout
        ],
        out_specs=pl.BlockSpec((1, S, T_pad), lambda b, l: (b, 0, 0)),
        scratch_shapes=[pltpu.VMEM((S, D), jnp.float32)],          # resident activation
        compiler_params=pltpu.CompilerParams(
            dimension_semantics=("parallel", "arbitrary")),
    )(x, bias, wq, wk, wv, wo, ln1g, ln1b, ln2g, ln2b,
      w1, b1, w2, b2, wout, bout)

    return out[:, :, :T]


# ------------------------- pure-JAX reference ------------------------------
def decoder_forward_ref(dec_inp, pe, params, d_model):
    x = params["embedding"][dec_inp] * np.sqrt(d_model)
    x = x + pe
    for blk in params["blocks"]:
        mu = jnp.mean(x, -1, keepdims=True)
        var = jnp.mean((x - mu) ** 2, -1, keepdims=True)
        nx = (x - mu) * jax.lax.rsqrt(var + LN_EPS) * blk["ln1_g"] + blk["ln1_b"]
        S = x.shape[1]
        mask = jnp.tril(jnp.ones((S, S), bool))
        heads = []
        for hh in range(blk["wq"].shape[0]):
            q = nx @ blk["wq"][hh]
            k = nx @ blk["wk"][hh]
            v = nx @ blk["wv"][hh]
            s = (q @ jnp.swapaxes(k, -1, -2)) / np.sqrt(q.shape[-1])
            s = jnp.where(mask, s, -jnp.inf)
            p = jax.nn.softmax(s, axis=-1)
            heads.append(p @ v)
        x = x + jnp.concatenate(heads, -1) @ blk["wo"]
        mu = jnp.mean(x, -1, keepdims=True)
        var = jnp.mean((x - mu) ** 2, -1, keepdims=True)
        nx2 = (x - mu) * jax.lax.rsqrt(var + LN_EPS) * blk["ln2_g"] + blk["ln2_b"]
        x = x + jnp.maximum(nx2 @ blk["w1"] + blk["b1"], 0.0) @ blk["w2"] + blk["b2"]
    return x @ params["l1_w"] + params["l1_b"]


def init_params(key, num_blocks, d_model, d_middle, d_token, h, d_q, d_k, d_v):
    ks = jax.random.split(key, 2 + num_blocks)
    params = {
        "embedding": jax.random.normal(ks[0], (d_token, d_model), jnp.float32) * 0.02,
        "l1_w": jax.random.normal(ks[1], (d_model, d_token), jnp.float32) * 0.02,
        "l1_b": jnp.zeros((1, d_token), jnp.float32),
        "blocks": [],
    }
    for i in range(num_blocks):
        bk = jax.random.split(ks[2 + i], 7)
        params["blocks"].append({
            "wq": jax.random.normal(bk[0], (h, d_model, d_q), jnp.float32) * 0.05,
            "wk": jax.random.normal(bk[1], (h, d_model, d_k), jnp.float32) * 0.05,
            "wv": jax.random.normal(bk[2], (h, d_model, d_v), jnp.float32) * 0.05,
            "wo": jax.random.normal(bk[3], (h * d_v, d_model), jnp.float32) * 0.05,
            "ln1_g": jnp.ones((1, d_model), jnp.float32),
            "ln1_b": jnp.zeros((1, d_model), jnp.float32),
            "ln2_g": jnp.ones((1, d_model), jnp.float32),
            "ln2_b": jnp.zeros((1, d_model), jnp.float32),
            "w1": jax.random.normal(bk[4], (d_model, d_middle), jnp.float32) * 0.05,
            "b1": jnp.zeros((1, d_middle), jnp.float32),
            "w2": jax.random.normal(bk[5], (d_middle, d_model), jnp.float32) * 0.05,
            "b2": jnp.zeros((1, d_model), jnp.float32),
        })
    return params


if __name__ == "__main__":
    num_blocks, d_model, d_middle, d_token = 2, 32, 64, 50
    h, d_q, d_k, d_v = 2, 16, 16, 16
    B, S = 2, 8

    key = jax.random.PRNGKey(0)
    kp, kt, kpe = jax.random.split(key, 3)
    params = init_params(kp, num_blocks, d_model, d_middle, d_token, h, d_q, d_k, d_v)
    dec_inp = jax.random.randint(kt, (B, S), 0, d_token)          # token ids
    pe = jax.random.normal(kpe, (1, S, d_model), jnp.float32) * 0.1

    out = decoder_forward(dec_inp, pe, params, d_model)
    out = jax.block_until_ready(out)
    assert out.shape == (B, S, d_token)

    ref = decoder_forward_ref(dec_inp, pe, params, d_model)
    np.testing.assert_allclose(np.asarray(out), np.asarray(ref), rtol=2e-3, atol=2e-3)

    print("KERNEL_OK")
</pallas_src>

<mosaic_0001>
module attributes {stable_mosaic.version = 11 : i64} {
  func.func @kernel(%arg0: i32, %arg1: i32, %arg2: memref<1x8x32xf32, #tpu.memory_space<vmem>>, %arg3: memref<8x8xf32, #tpu.memory_space<vmem>>, %arg4: memref<1x2x32x16xf32, #tpu.memory_space<vmem>>, %arg5: memref<1x2x32x16xf32, #tpu.memory_space<vmem>>, %arg6: memref<1x2x32x16xf32, #tpu.memory_space<vmem>>, %arg7: memref<1x2x16x32xf32, #tpu.memory_space<vmem>>, %arg8: memref<1x1x32xf32, #tpu.memory_space<vmem>>, %arg9: memref<1x1x32xf32, #tpu.memory_space<vmem>>, %arg10: memref<1x1x32xf32, #tpu.memory_space<vmem>>, %arg11: memref<1x1x32xf32, #tpu.memory_space<vmem>>, %arg12: memref<1x32x64xf32, #tpu.memory_space<vmem>>, %arg13: memref<1x1x64xf32, #tpu.memory_space<vmem>>, %arg14: memref<1x64x32xf32, #tpu.memory_space<vmem>>, %arg15: memref<1x1x32xf32, #tpu.memory_space<vmem>>, %arg16: memref<32x128xf32, #tpu.memory_space<vmem>>, %arg17: memref<1x128xf32, #tpu.memory_space<vmem>>, %arg18: memref<1x8x128xf32, #tpu.memory_space<vmem>>, %arg19: memref<8x32xf32, #tpu.memory_space<vmem>>) attributes {dimension_semantics = [#tpu.dimension_semantics<parallel>, #tpu.dimension_semantics<arbitrary>], iteration_bounds = array<i64: 2, 2>, scalar_prefetch = 0 : i64, scratch_operands = 1 : i64, tpu.core_type = #tpu.core_type<tc>, window_params = [{transform_indices = @transform_0, window_bounds = array<i64: 1, 8, 32>}, {pipeline_mode = #tpu.pipeline_mode<synchronous>, transform_indices = @transform_1, window_bounds = array<i64: 8, 8>}, {transform_indices = @transform_2, window_bounds = array<i64: 1, 2, 32, 16>}, {transform_indices = @transform_3, window_bounds = array<i64: 1, 2, 32, 16>}, {transform_indices = @transform_4, window_bounds = array<i64: 1, 2, 32, 16>}, {transform_indices = @transform_5, window_bounds = array<i64: 1, 2, 16, 32>}, {transform_indices = @transform_6, window_bounds = array<i64: 1, 1, 32>}, {transform_indices = @transform_7, window_bounds = array<i64: 1, 1, 32>}, {transform_indices = @transform_8, window_bounds = array<i64: 1, 1, 32>}, {transform_indices = @transform_9, window_bounds = array<i64: 1, 1, 32>}, {transform_indices = @transform_10, window_bounds = array<i64: 1, 32, 64>}, {transform_indices = @transform_11, window_bounds = array<i64: 1, 1, 64>}, {transform_indices = @transform_12, window_bounds = array<i64: 1, 64, 32>}, {transform_indices = @transform_13, window_bounds = array<i64: 1, 1, 32>}, {pipeline_mode = #tpu.pipeline_mode<synchronous>, transform_indices = @transform_14, window_bounds = array<i64: 32, 128>}, {pipeline_mode = #tpu.pipeline_mode<synchronous>, transform_indices = @transform_15, window_bounds = array<i64: 1, 128>}, {transform_indices = @transform_16, window_bounds = array<i64: 1, 8, 128>}]} {
    %c0_i32 = arith.constant 0 : i32
    %0 = arith.cmpi eq, %arg1, %c0_i32 : i32
    %1 = arith.extui %0 : i1 to i32
    %c0_i32_0 = arith.constant 0 : i32
    %2 = arith.cmpi ne, %1, %c0_i32_0 : i32
    scf.if %2 {
      %c0_69 = arith.constant 0 : index
      %c0_70 = arith.constant 0 : index
      %c0_71 = arith.constant 0 : index
      %110 = vector.load %arg2[%c0_69, %c0_70, %c0_71] : memref<1x8x32xf32, #tpu.memory_space<vmem>>, vector<1x8x32xf32>
      %111 = vector.shape_cast %110 : vector<1x8x32xf32> to vector<8x32xf32>
      %c0_72 = arith.constant 0 : index
      %c0_73 = arith.constant 0 : index
      %112 = vector.load %arg19[%c0_72, %c0_73] : memref<8x32xf32, #tpu.memory_space<vmem>>, vector<8x32xf32>
      tpu.vector_store %arg19[%c0_72, %c0_73], %111 {strides = array<i32>} : memref<8x32xf32, #tpu.memory_space<vmem>>, vector<8x32xf32>,
    } else {
    }
    %c0 = arith.constant 0 : index
    %c0_1 = arith.constant 0 : index
    %3 = vector.load %arg19[%c0, %c0_1] : memref<8x32xf32, #tpu.memory_space<vmem>>, vector<8x32xf32>
    %c0_2 = arith.constant 0 : index
    %c0_3 = arith.constant 0 : index
    %c0_4 = arith.constant 0 : index
    %4 = vector.load %arg8[%c0_2, %c0_3, %c0_4] : memref<1x1x32xf32, #tpu.memory_space<vmem>>, vector<1x1x32xf32>
    %5 = vector.shape_cast %4 : vector<1x1x32xf32> to vector<1x32xf32>
    %c0_5 = arith.constant 0 : index
    %c0_6 = arith.constant 0 : index
    %c0_7 = arith.constant 0 : index
    %6 = vector.load %arg9[%c0_5, %c0_6, %c0_7] : memref<1x1x32xf32, #tpu.memory_space<vmem>>, vector<1x1x32xf32>
    %7 = vector.shape_cast %6 : vector<1x1x32xf32> to vector<1x32xf32>
    %cst = arith.constant dense<0.000000e+00> : vector<8xf32>
    %8 = vector.multi_reduction <add>, %3, %cst [1] : vector<8x32xf32> to vector<8xf32>
    %9 = vector.shape_cast %8 : vector<8xf32> to vector<8x1xf32>
    %cst_8 = arith.constant 3.200000e+01 : f32
    %10 = vector.broadcast %cst_8 : f32 to vector<8x1xf32>
    %11 = arith.divf %9, %10 : vector<8x1xf32>
    %12 = vector.broadcast %11 : vector<8x1xf32> to vector<8x32xf32>
    %13 = arith.subf %3, %12 : vector<8x32xf32>
    %14 = arith.mulf %13, %13 : vector<8x32xf32>
    %cst_9 = arith.constant dense<0.000000e+00> : vector<8xf32>
    %15 = vector.multi_reduction <add>, %14, %cst_9 [1] : vector<8x32xf32> to vector<8xf32>
    %16 = vector.shape_cast %15 : vector<8xf32> to vector<8x1xf32>
    %cst_10 = arith.constant 3.200000e+01 : f32
    %17 = vector.broadcast %cst_10 : f32 to vector<8x1xf32>
    %18 = arith.divf %16, %17 : vector<8x1xf32>
    %cst_11 = arith.constant 9.99999974E-6 : f32
    %19 = vector.broadcast %cst_11 : f32 to vector<8x1xf32>
    %20 = arith.addf %18, %19 : vector<8x1xf32>
    %21 = math.rsqrt %20 : vector<8x1xf32>
    %22 = vector.broadcast %21 : vector<8x1xf32> to vector<8x32xf32>
    %23 = arith.mulf %13, %22 : vector<8x32xf32>
    %24 = vector.broadcast %5 : vector<1x32xf32> to vector<8x32xf32>
    %25 = arith.mulf %23, %24 : vector<8x32xf32>
    %26 = vector.broadcast %7 : vector<1x32xf32> to vector<8x32xf32>
    %27 = arith.addf %25, %26 : vector<8x32xf32>
    %28 = vector.shape_cast %27 : vector<8x32xf32> to vector<1x8x32xf32>
    %29 = vector.shape_cast %28 : vector<1x8x32xf32> to vector<1x8x32xf32>
    %30 = vector.broadcast %29 : vector<1x8x32xf32> to vector<2x8x32xf32>
    %c0_12 = arith.constant 0 : index
    %c0_13 = arith.constant 0 : index
    %c0_14 = arith.constant 0 : index
    %c0_15 = arith.constant 0 : index
    %31 = vector.load %arg4[%c0_12, %c0_13, %c0_14, %c0_15] : memref<1x2x32x16xf32, #tpu.memory_space<vmem>>, vector<1x2x32x16xf32>
    %32 = vector.shape_cast %31 : vector<1x2x32x16xf32> to vector<2x32x16xf32>
    "tpu.trace_start"() <{level = 10 : i32, message = "hsd,hdq->hsq"}> : () -> ()
    %cst_16 = arith.constant dense<0.000000e+00> : vector<2x8x16xf32>
    %33 = tpu.matmul %30, %32, %cst_16 {dimension_numbers = #tpu.dot_dimension_numbers<[2], [1], [1], [2], [0, 0, 0, 1, 1, 2], [0], [0]>} : vector<2x8x32xf32>, vector<2x32x16xf32>, vector<2x8x16xf32> -> vector<2x8x16xf32>
    "tpu.trace_stop"() : () -> ()
    %c0_17 = arith.constant 0 : index
    %c0_18 = arith.constant 0 : index
    %c0_19 = arith.constant 0 : index
    %c0_20 = arith.constant 0 : index
    %34 = vector.load %arg5[%c0_17, %c0_18, %c0_19, %c0_20] : memref<1x2x32x16xf32, #tpu.memory_space<vmem>>, vector<1x2x32x16xf32>
    %35 = vector.shape_cast %34 : vector<1x2x32x16xf32> to vector<2x32x16xf32>
    "tpu.trace_start"() <{level = 10 : i32, message = "hsd,hdk->hsk"}> : () -> ()
    %cst_21 = arith.constant dense<0.000000e+00> : vector<2x8x16xf32>
    %36 = tpu.matmul %30, %35, %cst_21 {dimension_numbers = #tpu.dot_dimension_numbers<[2], [1], [1], [2], [0, 0, 0, 1, 1, 2], [0], [0]>} : vector<2x8x32xf32>, vector<2x32x16xf32>, vector<2x8x16xf32> -> vector<2x8x16xf32>
    "tpu.trace_stop"() : () -> ()
    %c0_22 = arith.constant 0 : index
    %c0_23 = arith.constant 0 : index
    %c0_24 = arith.constant 0 : index
    %c0_25 = arith.constant 0 : index
    %37 = vector.load %arg6[%c0_22, %c0_23, %c0_24, %c0_25] : memref<1x2x32x16xf32, #tpu.memory_space<vmem>>, vector<1x2x32x16xf32>
    %38 = vector.shape_cast %37 : vector<1x2x32x16xf32> to vector<2x32x16xf32>
    "tpu.trace_start"() <{level = 10 : i32, message = "hsd,hdv->hsv"}> : () -> ()
    %cst_26 = arith.constant dense<0.000000e+00> : vector<2x8x16xf32>
    %39 = tpu.matmul %30, %38, %cst_26 {dimension_numbers = #tpu.dot_dimension_numbers<[2], [1], [1], [2], [0, 0, 0, 1, 1, 2], [0], [0]>} : vector<2x8x32xf32>, vector<2x32x16xf32>, vector<2x8x16xf32> -> vector<2x8x16xf32>
    "tpu.trace_stop"() : () -> ()
    "tpu.trace_start"() <{level = 10 : i32, message = "hqe,hke->hqk"}> : () -> ()
    %cst_27 = arith.constant dense<0.000000e+00> : vector<2x8x8xf32>
    %40 = tpu.matmul %33, %36, %cst_27 {dimension_numbers = #tpu.dot_dimension_numbers<[2], [2], [1], [1], [0, 0, 0, 1, 1, 1], [0], [0]>} : vector<2x8x16xf32>, vector<2x8x16xf32>, vector<2x8x8xf32> -> vector<2x8x8xf32>
    "tpu.trace_stop"() : () -> ()
    %c0_28 = arith.constant 0 : index
    %c0_29 = arith.constant 0 : index
    %41 = vector.load %arg3[%c0_28, %c0_29] : memref<8x8xf32, #tpu.memory_space<vmem>>, vector<8x8xf32>
    %42 = vector.shape_cast %41 : vector<8x8xf32> to vector<1x8x8xf32>
    %43 = vector.broadcast %42 : vector<1x8x8xf32> to vector<2x8x8xf32>
    %44 = arith.addf %40, %43 : vector<2x8x8xf32>
    %cst_30 = arith.constant dense<0xFF800000> : vector<2x8xf32>
    %45 = vector.multi_reduction <maximumf>, %44, %cst_30 [2] : vector<2x8x8xf32> to vector<2x8xf32>
    %46 = vector.shape_cast %45 : vector<2x8xf32> to vector<2x8x1xf32>
    %47 = vector.broadcast %46 : vector<2x8x1xf32> to vector<2x8x8xf32>
    %48 = arith.subf %44, %47 : vector<2x8x8xf32>
    %49 = math.exp %48 : vector<2x8x8xf32>
    %cst_31 = arith.constant dense<0.000000e+00> : vector<2x8xf32>
    %50 = vector.multi_reduction <add>, %49, %cst_31 [2] : vector<2x8x8xf32> to vector<2x8xf32>
    %51 = vector.shape_cast %50 : vector<2x8xf32> to vector<2x8x1xf32>
    %52 = tpu.reciprocal %51 {approx = true} : vector<2x8x1xf32> -> vector<2x8x1xf32>
    %53 = arith.mulf %51, %52 : vector<2x8x1xf32>
    %cst_32 = arith.constant 2.000000e+00 : f32
    %54 = vector.broadcast %cst_32 : f32 to vector<2x8x1xf32>
    %55 = arith.subf %54, %53 : vector<2x8x1xf32>
    %56 = arith.mulf %52, %55 : vector<2x8x1xf32>
    %57 = vector.broadcast %56 : vector<2x8x1xf32> to vector<2x8x8xf32>
    %58 = arith.mulf %49, %57 : vector<2x8x8xf32>
    "tpu.trace_start"() <{level = 10 : i32, message = "hqk,hkv->hqv"}> : () -> ()
    %cst_33 = arith.constant dense<0.000000e+00> : vector<2x8x16xf32>
    %59 = tpu.matmul %58, %39, %cst_33 {dimension_numbers = #tpu.dot_dimension_numbers<[2], [1], [1], [2], [0, 0, 0, 1, 1, 2], [0], [0]>} : vector<2x8x8xf32>, vector<2x8x16xf32>, vector<2x8x16xf32> -> vector<2x8x16xf32>
    "tpu.trace_stop"() : () -> ()
    %c0_34 = arith.constant 0 : index
    %c0_35 = arith.constant 0 : index
    %c0_36 = arith.constant 0 : index
    %c0_37 = arith.constant 0 : index
    %60 = vector.load %arg7[%c0_34, %c0_35, %c0_36, %c0_37] : memref<1x2x16x32xf32, #tpu.memory_space<vmem>>, vector<1x2x16x32xf32>
    %61 = vector.shape_cast %60 : vector<1x2x16x32xf32> to vector<2x16x32xf32>
    "tpu.trace_start"() <{level = 10 : i32, message = "hqv,hvd->hqd"}> : () -> ()
    %cst_38 = arith.constant dense<0.000000e+00> : vector<2x8x32xf32>
    %62 = tpu.matmul %59, %61, %cst_38 {dimension_numbers = #tpu.dot_dimension_numbers<[2], [1], [1], [2], [0, 0, 0, 1, 1, 2], [0], [0]>} : vector<2x8x16xf32>, vector<2x16x32xf32>, vector<2x8x32xf32> -> vector<2x8x32xf32>
    "tpu.trace_stop"() : () -> ()
    %cst_39 = arith.constant dense<0.000000e+00> : vector<8x32xf32>
    %63 = vector.multi_reduction <add>, %62, %cst_39 [0] : vector<2x8x32xf32> to vector<8x32xf32>
    %64 = arith.addf %3, %63 : vector<8x32xf32>
    %c0_40 = arith.constant 0 : index
    %c0_41 = arith.constant 0 : index
    %c0_42 = arith.constant 0 : index
    %65 = vector.load %arg10[%c0_40, %c0_41, %c0_42] : memref<1x1x32xf32, #tpu.memory_space<vmem>>, vector<1x1x32xf32>
    %66 = vector.shape_cast %65 : vector<1x1x32xf32> to vector<1x32xf32>
    %c0_43 = arith.constant 0 : index
    %c0_44 = arith.constant 0 : index
    %c0_45 = arith.constant 0 : index
    %67 = vector.load %arg11[%c0_43, %c0_44, %c0_45] : memref<1x1x32xf32, #tpu.memory_space<vmem>>, vector<1x1x32xf32>
    %68 = vector.shape_cast %67 : vector<1x1x32xf32> to vector<1x32xf32>
    %cst_46 = arith.constant dense<0.000000e+00> : vector<8xf32>
    %69 = vector.multi_reduction <add>, %64, %cst_46 [1] : vector<8x32xf32> to vector<8xf32>
    %70 = vector.shape_cast %69 : vector<8xf32> to vector<8x1xf32>
    %cst_47 = arith.constant 3.200000e+01 : f32
    %71 = vector.broadcast %cst_47 : f32 to vector<8x1xf32>
    %72 = arith.divf %70, %71 : vector<8x1xf32>
    %73 = vector.broadcast %72 : vector<8x1xf32> to vector<8x32xf32>
    %74 = arith.subf %64, %73 : vector<8x32xf32>
    %75 = arith.mulf %74, %74 : vector<8x32xf32>
    %cst_48 = arith.constant dense<0.000000e+00> : vector<8xf32>
    %76 = vector.multi_reduction <add>, %75, %cst_48 [1] : vector<8x32xf32> to vector<8xf32>
    %77 = vector.shape_cast %76 : vector<8xf32> to vector<8x1xf32>
    %cst_49 = arith.constant 3.200000e+01 : f32
    %78 = vector.broadcast %cst_49 : f32 to vector<8x1xf32>
    %79 = arith.divf %77, %78 : vector<8x1xf32>
    %cst_50 = arith.constant 9.99999974E-6 : f32
    %80 = vector.broadcast %cst_50 : f32 to vector<8x1xf32>
    %81 = arith.addf %79, %80 : vector<8x1xf32>
    %82 = math.rsqrt %81 : vector<8x1xf32>
    %83 = vector.broadcast %82 : vector<8x1xf32> to vector<8x32xf32>
    %84 = arith.mulf %74, %83 : vector<8x32xf32>
    %85 = vector.broadcast %66 : vector<1x32xf32> to vector<8x32xf32>
    %86 = arith.mulf %84, %85 : vector<8x32xf32>
    %87 = vector.broadcast %68 : vector<1x32xf32> to vector<8x32xf32>
    %88 = arith.addf %86, %87 : vector<8x32xf32>
    %c0_51 = arith.constant 0 : index
    %c0_52 = arith.constant 0 : index
    %c0_53 = arith.constant 0 : index
    %89 = vector.load %arg12[%c0_51, %c0_52, %c0_53] : memref<1x32x64xf32, #tpu.memory_space<vmem>>, vector<1x32x64xf32>
    %90 = vector.shape_cast %89 : vector<1x32x64xf32> to vector<32x64xf32>
    %cst_54 = arith.constant dense<0.000000e+00> : vector<8x64xf32>
    %91 = tpu.matmul %88, %90, %cst_54 {dimension_numbers = #tpu.dot_dimension_numbers<[1], [0], [0], [1], [0, 0, 1, 1], [], []>} : vector<8x32xf32>, vector<32x64xf32>, vector<8x64xf32> -> vector<8x64xf32>
    %c0_55 = arith.constant 0 : index
    %c0_56 = arith.constant 0 : index
    %c0_57 = arith.constant 0 : index
    %92 = vector.load %arg13[%c0_55, %c0_56, %c0_57] : memref<1x1x64xf32, #tpu.memory_space<vmem>>, vector<1x1x64xf32>
    %93 = vector.shape_cast %92 : vector<1x1x64xf32> to vector<1x64xf32>
    %94 = vector.broadcast %93 : vector<1x64xf32> to vector<8x64xf32>
    %95 = arith.addf %91, %94 : vector<8x64xf32>
    %cst_58 = arith.constant 0.000000e+00 : f32
    %96 = vector.broadcast %cst_58 : f32 to vector<8x64xf32>
    %97 = arith.maximumf %95, %96 : vector<8x64xf32>
    %c0_59 = arith.constant 0 : index
    %c0_60 = arith.constant 0 : index
    %c0_61 = arith.constant 0 : index
    %98 = vector.load %arg14[%c0_59, %c0_60, %c0_61] : memref<1x64x32xf32, #tpu.memory_space<vmem>>, vector<1x64x32xf32>
    %99 = vector.shape_cast %98 : vector<1x64x32xf32> to vector<64x32xf32>
    %cst_62 = arith.constant dense<0.000000e+00> : vector<8x32xf32>
    %100 = tpu.matmul %97, %99, %cst_62 {dimension_numbers = #tpu.dot_dimension_numbers<[1], [0], [0], [1], [0, 0, 1, 1], [], []>} : vector<8x64xf32>, vector<64x32xf32>, vector<8x32xf32> -> vector<8x32xf32>
    %101 = arith.addf %64, %100 : vector<8x32xf32>
    %c0_63 = arith.constant 0 : index
    %c0_64 = arith.constant 0 : index
    %c0_65 = arith.constant 0 : index
    %102 = vector.load %arg15[%c0_63, %c0_64, %c0_65] : memref<1x1x32xf32, #tpu.memory_space<vmem>>, vector<1x1x32xf32>
    %103 = vector.shape_cast %102 : vector<1x1x32xf32> to vector<1x32xf32>
    %104 = vector.broadcast %103 : vector<1x32xf32> to vector<8x32xf32>
    %105 = arith.addf %101, %104 : vector<8x32xf32>
    %c0_66 = arith.constant 0 : index
    %c0_67 = arith.constant 0 : index
    %106 = vector.load %arg19[%c0_66, %c0_67] : memref<8x32xf32, #tpu.memory_space<vmem>>, vector<8x32xf32>
    tpu.vector_store %arg19[%c0_66, %c0_67], %105 {strides = array<i32>} : memref<8x32xf32, #tpu.memory_space<vmem>>, vector<8x32xf32>,
    %c1_i32 = arith.constant 1 : i32
    %107 = arith.cmpi eq, %arg1, %c1_i32 : i32
    %108 = arith.extui %107 : i1 to i32
    %c0_i32_68 = arith.constant 0 : i32
    %109 = arith.cmpi ne, %108, %c0_i32_68 : i32
    scf.if %109 {
      %c0_69 = arith.constant 0 : index
      %c0_70 = arith.constant 0 : index
      %110 = vector.load %arg16[%c0_69, %c0_70] : memref<32x128xf32, #tpu.memory_space<vmem>>, vector<32x128xf32>
      %cst_71 = arith.constant dense<0.000000e+00> : vector<8x128xf32>
      %111 = tpu.matmul %105, %110, %cst_71 {dimension_numbers = #tpu.dot_dimension_numbers<[1], [0], [0], [1], [0, 0, 1, 1], [], []>} : vector<8x32xf32>, vector<32x128xf32>, vector<8x128xf32> -> vector<8x128xf32>
      %c0_72 = arith.constant 0 : index
      %c0_73 = arith.constant 0 : index
      %112 = vector.load %arg17[%c0_72, %c0_73] : memref<1x128xf32, #tpu.memory_space<vmem>>, vector<1x128xf32>
      %113 = vector.broadcast %112 : vector<1x128xf32> to vector<8x128xf32>
      %114 = arith.addf %111, %113 : vector<8x128xf32>
      %c0_74 = arith.constant 0 : index
      %c0_75 = arith.constant 0 : index
      %c0_76 = arith.constant 0 : index
      %115 = vector.load %arg18[%c0_74, %c0_75, %c0_76] : memref<1x8x128xf32, #tpu.memory_space<vmem>>, vector<1x8x128xf32>
      %116 = vector.shape_cast %115 : vector<1x8x128xf32> to vector<8x128xf32>
      %117 = vector.shape_cast %114 : vector<8x128xf32> to vector<1x8x128xf32>
      tpu.vector_store %arg18[%c0_74, %c0_75, %c0_76], %117 {strides = array<i32>} : memref<1x8x128xf32, #tpu.memory_space<vmem>>, vector<1x8x128xf32>,
    } else {
    }
    return
  }
  func.func @transform_0(%arg0: i32, %arg1: i32) -> (i32, i32, i32) {
    %c0_i32 = arith.constant 0 : i32
    %c0_i32_0 = arith.constant 0 : i32
    %c0_i32_1 = arith.constant 0 : i32
    return %arg0, %c0_i32, %c0_i32_0 : i32, i32, i32
  }
  func.func @transform_1(%arg0: i32, %arg1: i32) -> (i32, i32) {
    %c0_i32 = arith.constant 0 : i32
    %c0_i32_0 = arith.constant 0 : i32
    %c0_i32_1 = arith.constant 0 : i32
    return %c0_i32, %c0_i32_0 : i32, i32
  }
  func.func @transform_2(%arg0: i32, %arg1: i32) -> (i32, i32, i32, i32) {
    %c0_i32 = arith.constant 0 : i32
    %c0_i32_0 = arith.constant 0 : i32
    %c0_i32_1 = arith.constant 0 : i32
    %c0_i32_2 = arith.constant 0 : i32
    return %arg1, %c0_i32, %c0_i32_0, %c0_i32_1 : i32, i32, i32, i32
  }
  func.func @transform_3(%arg0: i32, %arg1: i32) -> (i32, i32, i32, i32) {
    %c0_i32 = arith.constant 0 : i32
    %c0_i32_0 = arith.constant 0 : i32
    %c0_i32_1 = arith.constant 0 : i32
    %c0_i32_2 = arith.constant 0 : i32
    return %arg1, %c0_i32, %c0_i32_0, %c0_i32_1 : i32, i32, i32, i32
  }
  func.func @transform_4(%arg0: i32, %arg1: i32) -> (i32, i32, i32, i32) {
    %c0_i32 = arith.constant 0 : i32
    %c0_i32_0 = arith.constant 0 : i32
    %c0_i32_1 = arith.constant 0 : i32
    %c0_i32_2 = arith.constant 0 : i32
    return %arg1, %c0_i32, %c0_i32_0, %c0_i32_1 : i32, i32, i32, i32
  }
  func.func @transform_5(%arg0: i32, %arg1: i32) -> (i32, i32, i32, i32) {
    %c0_i32 = arith.constant 0 : i32
    %c0_i32_0 = arith.constant 0 : i32
    %c0_i32_1 = arith.constant 0 : i32
    %c0_i32_2 = arith.constant 0 : i32
    return %arg1, %c0_i32, %c0_i32_0, %c0_i32_1 : i32, i32, i32, i32
  }
  func.func @transform_6(%arg0: i32, %arg1: i32) -> (i32, i32, i32) {
    %c0_i32 = arith.constant 0 : i32
    %c0_i32_0 = arith.constant 0 : i32
    %c0_i32_1 = arith.constant 0 : i32
    return %arg1, %c0_i32, %c0_i32_0 : i32, i32, i32
  }
  func.func @transform_7(%arg0: i32, %arg1: i32) -> (i32, i32, i32) {
    %c0_i32 = arith.constant 0 : i32
    %c0_i32_0 = arith.constant 0 : i32
    %c0_i32_1 = arith.constant 0 : i32
    return %arg1, %c0_i32, %c0_i32_0 : i32, i32, i32
  }
  func.func @transform_8(%arg0: i32, %arg1: i32) -> (i32, i32, i32) {
    %c0_i32 = arith.constant 0 : i32
    %c0_i32_0 = arith.constant 0 : i32
    %c0_i32_1 = arith.constant 0 : i32
    return %arg1, %c0_i32, %c0_i32_0 : i32, i32, i32
  }
  func.func @transform_9(%arg0: i32, %arg1: i32) -> (i32, i32, i32) {
    %c0_i32 = arith.constant 0 : i32
    %c0_i32_0 = arith.constant 0 : i32
    %c0_i32_1 = arith.constant 0 : i32
    return %arg1, %c0_i32, %c0_i32_0 : i32, i32, i32
  }
  func.func @transform_10(%arg0: i32, %arg1: i32) -> (i32, i32, i32) {
    %c0_i32 = arith.constant 0 : i32
    %c0_i32_0 = arith.constant 0 : i32
    %c0_i32_1 = arith.constant 0 : i32
    return %arg1, %c0_i32, %c0_i32_0 : i32, i32, i32
  }
  func.func @transform_11(%arg0: i32, %arg1: i32) -> (i32, i32, i32) {
    %c0_i32 = arith.constant 0 : i32
    %c0_i32_0 = arith.constant 0 : i32
    %c0_i32_1 = arith.constant 0 : i32
    return %arg1, %c0_i32, %c0_i32_0 : i32, i32, i32
  }
  func.func @transform_12(%arg0: i32, %arg1: i32) -> (i32, i32, i32) {
    %c0_i32 = arith.constant 0 : i32
    %c0_i32_0 = arith.constant 0 : i32
    %c0_i32_1 = arith.constant 0 : i32
    return %arg1, %c0_i32, %c0_i32_0 : i32, i32, i32
  }
  func.func @transform_13(%arg0: i32, %arg1: i32) -> (i32, i32, i32) {
    %c0_i32 = arith.constant 0 : i32
    %c0_i32_0 = arith.constant 0 : i32
    %c0_i32_1 = arith.constant 0 : i32
    return %arg1, %c0_i32, %c0_i32_0 : i32, i32, i32
  }
  func.func @transform_14(%arg0: i32, %arg1: i32) -> (i32, i32) {
    %c0_i32 = arith.constant 0 : i32
    %c0_i32_0 = arith.constant 0 : i32
    %c0_i32_1 = arith.constant 0 : i32
    return %c0_i32, %c0_i32_0 : i32, i32
  }
  func.func @transform_15(%arg0: i32, %arg1: i32) -> (i32, i32) {
    %c0_i32 = arith.constant 0 : i32
    %c0_i32_0 = arith.constant 0 : i32
    %c0_i32_1 = arith.constant 0 : i32
    return %c0_i32, %c0_i32_0 : i32, i32
  }
  func.func @transform_16(%arg0: i32, %arg1: i32) -> (i32, i32, i32) {
    %c0_i32 = arith.constant 0 : i32
    %c0_i32_0 = arith.constant 0 : i32
    %c0_i32_1 = arith.constant 0 : i32
    return %arg0, %c0_i32, %c0_i32_0 : i32, i32, i32
  }
}

</mosaic_0001>

<llo_original>
// kernel: tpu_custom_call.1
$region0: #{tpu_custom_call.1}
  #allocation0 [shape = 'u32[]', space=smem, size = 0x4, offset = 0x4, fixed_abs, tag = 'smem constant byte address 0x4 - core index']
  #allocation1 [shape = 'u32[144,128]{1,0:T(1,128)}', space=vmem, size = 0x12000, scoped, tag = 'internal scratch']
  #allocation2 [shape = 'f32[8,32]{1,0:T(8,128)}', space=vmem, size = 0x1000, scoped, tag = 'scratch operand']
  %s0 = inlined_call_operand.vmem [shape: f32[2,8,32], index: 0, kind: input, shape index: {}]
  %s1 = inlined_call_operand.vmem [shape: f32[8,8], index: 1, kind: input, shape index: {}]
  %s2 = inlined_call_operand.vmem [shape: f32[2,2,32,16], index: 2, kind: input, shape index: {}]
  %s3 = inlined_call_operand.vmem [shape: f32[2,2,32,16], index: 3, kind: input, shape index: {}]
  %s4 = inlined_call_operand.vmem [shape: f32[2,2,32,16], index: 4, kind: input, shape index: {}]
  %s5 = inlined_call_operand.vmem [shape: f32[2,2,16,32], index: 5, kind: input, shape index: {}]
  %s6 = inlined_call_operand.vmem [shape: f32[2,1,32], index: 6, kind: input, shape index: {}]
  %s7 = inlined_call_operand.vmem [shape: f32[2,1,32], index: 7, kind: input, shape index: {}]
  %s8 = inlined_call_operand.vmem [shape: f32[2,1,32], index: 8, kind: input, shape index: {}]
  %s9 = inlined_call_operand.vmem [shape: f32[2,1,32], index: 9, kind: input, shape index: {}]
  %s10 = inlined_call_operand.vmem [shape: f32[2,32,64], index: 10, kind: input, shape index: {}]
  %s11 = inlined_call_operand.vmem [shape: f32[2,1,64], index: 11, kind: input, shape index: {}]
  %s12 = inlined_call_operand.vmem [shape: f32[2,64,32], index: 12, kind: input, shape index: {}]
  %s13 = inlined_call_operand.vmem [shape: f32[2,1,32], index: 13, kind: input, shape index: {}]
  %s14 = inlined_call_operand.vmem [shape: f32[32,128], index: 14, kind: input, shape index: {}]
  %s15 = inlined_call_operand.vmem [shape: f32[1,128], index: 15, kind: input, shape index: {}]
  %s16 = inlined_call_operand.hbm [shape: f32[2,8,128], index: 16, kind: output, shape index: {}]
  %s17 = sld [smem:[#allocation0]]
  $region105: #{tpu_custom_call.1} parent=0
    _
  %s19 = ssub.s32 1, %s17
  %s20 = scalar_select 0, %s19, %s17
  $region1: #{tpu_custom_call.1} parent=0
    #allocation3 [shape = 'u8[8192]{0}', space=vmem, size = 0x2000, scoped, tag = 'output window, operand 0']
    #allocation4 [shape = 's32[2]{0}', space=sflag, size = 0x8, scoped, tag = 'scoped memory for tpu_custom_call.1']
    %21 = vsyncpa [#allocation4], 0
    %s22 = scalar_lea.sflag [#allocation4], 1
    %23 = vsyncpa %s22, 0
    loop: start=0, step=1, limit=6
    $region2: #{tpu_custom_call.1} parent=1 // loop_pre_header
      _
    $region3: #{tpu_custom_call.1} parent=1 // loop_header
      %s25 = sphi 0, %s29
      %p26 = scmp.ge.s32.totalorder %s25, 6
      %s32 = sphi 0, %s44
      %s33 = sphi 0, %s40
      %s34 = sphi 0, %s32
      %s35 = sphi 0, %s33
      %s36 = sphi 0, %s34
      %s37 = sphi 0, %s35
      %s47 = sphi 0, %s49
      %s50 = sphi 0, %s47
      %s51 = sphi 0, %s50
      %s67 = sphi 0, %s51
      %s71 = sphi 0, %s71
      %s73 = sphi 0, %s71
      %s74 = sphi 0, %s73
      %s88 = sphi 0, %s74
      %s94 = sphi 0, %s96
      %s97 = sphi 0, %s94
      %s98 = sphi 0, %s97
      %s114 = sphi 0, %s98
      %s120 = sphi 0, %s122
      %s123 = sphi 0, %s120
      %s124 = sphi 0, %s123
      %s140 = sphi 0, %s124
      %s146 = sphi 0, %s148
      %s149 = sphi 0, %s146
      %s150 = sphi 0, %s149
      %s166 = sphi 0, %s150
      %s172 = sphi 0, %s174
      %s175 = sphi 0, %s172
      %s176 = sphi 0, %s175
      %s192 = sphi 0, %s176
      %s198 = sphi 0, %s200
      %s201 = sphi 0, %s198
      %s202 = sphi 0, %s201
      %s218 = sphi 0, %s202
      %s224 = sphi 0, %s226
      %s227 = sphi 0, %s224
      %s228 = sphi 0, %s227
      %s244 = sphi 0, %s228
      %s250 = sphi 0, %s252
      %s253 = sphi 0, %s250
      %s254 = sphi 0, %s253
      %s270 = sphi 0, %s254
      %s276 = sphi 0, %s278
      %s279 = sphi 0, %s276
      %s280 = sphi 0, %s279
      %s296 = sphi 0, %s280
      %s302 = sphi 0, %s304
      %s305 = sphi 0, %s302
      %s306 = sphi 0, %s305
      %s322 = sphi 0, %s306
      %s328 = sphi 0, %s330
      %s331 = sphi 0, %s328
      %s332 = sphi 0, %s331
      %s348 = sphi 0, %s332
      %s354 = sphi 0, %s356
      %s357 = sphi 0, %s354
      %s358 = sphi 0, %s357
      %s374 = sphi 0, %s358
      %s380 = sphi 0, %s382
      %s383 = sphi 0, %s380
      %s384 = sphi 0, %s383
      %s400 = sphi 0, %s384
      %s404 = sphi 0, %s404
      %s406 = sphi 0, %s404
      %s407 = sphi 0, %s406
      %s421 = sphi 0, %s407
      %s425 = sphi 0, %s425
      %s427 = sphi 0, %s425
      %s428 = sphi 0, %s427
      %s442 = sphi 0, %s428
      %s448 = sphi 0, %s450
      %s451 = sphi 0, %s448
      %s452 = sphi 0, %s451
      %s468 = sphi 0, %s452
    $region4: #{tpu_custom_call.1} parent=1 // loop_header_branch
      %28 = sbr.rel (%p26) target = $region8
    $region5: #{tpu_custom_call.1} parent=1 // loop_body
      %s30 = ssub.s32 %s25, 1
      %s31 = ssub.s32 %s25, 2
      %s38 = sadd.s32 1, %s33
      %p39 = scmp.ge.s32.totalorder %s38, 2
      %s40 = scalar_select %p39, 0, %s38
      %s41 = sadd.s32 1, %s32
      %s42 = scalar_select %p39, %s41, %s32
      %p43 = scmp.ge.s32.totalorder %s42, 2
      %s44 = scalar_select %p43, 0, %s42
      %s45 = ssub.s32 %s32, %s44
      %p46 = scmp.eq.s32.totalorder %s45, 0
      %s48 = sadd.s32 %s47, 1
      %s49 = scalar_select %p46, %s47, %s48
      %p52 = pneg %p46
      %p53 = scmp.eq.s32.totalorder %s25, 3
      %p54 = por %p52, %p53
      %p55 = scmp.ne.s32.totalorder %s47, %s50
      %p56 = scmp.eq.s32.totalorder %s25, 0
      %p57 = por %p55, %p56
      %p58 = scmp.ne.s32.totalorder %s47, %s50
      %p59 = scmp.eq.s32.totalorder %s30, 3
      %p60 = por %p58, %p59
      %p61 = scmp.ne.s32.totalorder %s50, %s51
      %p62 = scmp.eq.s32.totalorder %s30, 0
      %p63 = por %p61, %p62
      %p64 = scmp.ne.s32.totalorder %s50, %s51
      %p65 = scmp.eq.s32.totalorder %s31, 3
      %p66 = por %p64, %p65
      %p68 = scmp.ne.s32.totalorder %s51, %s67
      %p69 = scmp.eq.s32.totalorder %s31, 0
      %p70 = por %p68, %p69
      %s72 = sadd.s32 %s71, 1
      %p75 = scmp.eq.s32.totalorder %s25, 3
      %p76 = scmp.ne.s32.totalorder %s71, %s73
      %p77 = scmp.eq.s32.totalorder %s25, 0
      %p78 = por %p76, %p77
      %p79 = scmp.ne.s32.totalorder %s71, %s73
      %p80 = scmp.eq.s32.totalorder %s30, 3
      %p81 = por %p79, %p80
      %p82 = scmp.ne.s32.totalorder %s73, %s74
      %p83 = scmp.eq.s32.totalorder %s30, 0
      %p84 = por %p82, %p83
      %p85 = scmp.ne.s32.totalorder %s73, %s74
      %p86 = scmp.eq.s32.totalorder %s31, 3
      %p87 = por %p85, %p86
      %p89 = scmp.ne.s32.totalorder %s74, %s88
      %p90 = scmp.eq.s32.totalorder %s31, 0
      %p91 = por %p89, %p90
      %s92 = ssub.s32 %s33, %s40
      %p93 = scmp.eq.s32.totalorder %s92, 0
      %s95 = sadd.s32 %s94, 1
      %s96 = scalar_select %p93, %s94, %s95
      %p99 = pneg %p93
      %p100 = scmp.eq.s32.totalorder %s25, 3
      %p101 = por %p99, %p100
      %p102 = scmp.ne.s32.totalorder %s94, %s97
      %p103 = scmp.eq.s32.totalorder %s25, 0
      %p104 = por %p102, %p103
      %p105 = scmp.ne.s32.totalorder %s94, %s97
      %p106 = scmp.eq.s32.totalorder %s30, 3
      %p107 = por %p105, %p106
      %p108 = scmp.ne.s32.totalorder %s97, %s98
      %p109 = scmp.eq.s32.totalorder %s30, 0
      %p110 = por %p108, %p109
      %p111 = scmp.ne.s32.totalorder %s97, %s98
      %p112 = scmp.eq.s32.totalorder %s31, 3
      %p113 = por %p111, %p112
      %p115 = scmp.ne.s32.totalorder %s98, %s114
      %p116 = scmp.eq.s32.totalorder %s31, 0
      %p117 = por %p115, %p116
      %s118 = ssub.s32 %s33, %s40
      %p119 = scmp.eq.s32.totalorder %s118, 0
      %s121 = sadd.s32 %s120, 1
      %s122 = scalar_select %p119, %s120, %s121
      %p125 = pneg %p119
      %p126 = scmp.eq.s32.totalorder %s25, 3
      %p127 = por %p125, %p126
      %p128 = scmp.ne.s32.totalorder %s120, %s123
      %p129 = scmp.eq.s32.totalorder %s25, 0
      %p130 = por %p128, %p129
      %p131 = scmp.ne.s32.totalorder %s120, %s123
      %p132 = scmp.eq.s32.totalorder %s30, 3
      %p133 = por %p131, %p132
      %p134 = scmp.ne.s32.totalorder %s123, %s124
      %p135 = scmp.eq.s32.totalorder %s30, 0
      %p136 = por %p134, %p135
      %p137 = scmp.ne.s32.totalorder %s123, %s124
      %p138 = scmp.eq.s32.totalorder %s31, 3
      %p139 = por %p137, %p138
      %p141 = scmp.ne.s32.totalorder %s124, %s140
      %p142 = scmp.eq.s32.totalorder %s31, 0
      %p143 = por %p141, %p142
      %s144 = ssub.s32 %s33, %s40
      %p145 = scmp.eq.s32.totalorder %s144, 0
      %s147 = sadd.s32 %s146, 1
      %s148 = scalar_select %p145, %s146, %s147
      %p151 = pneg %p145
      %p152 = scmp.eq.s32.totalorder %s25, 3
      %p153 = por %p151, %p152
      %p154 = scmp.ne.s32.totalorder %s146, %s149
      %p155 = scmp.eq.s32.totalorder %s25, 0
      %p156 = por %p154, %p155
      %p157 = scmp.ne.s32.totalorder %s146, %s149
      %p158 = scmp.eq.s32.totalorder %s30, 3
      %p159 = por %p157, %p158
      %p160 = scmp.ne.s32.totalorder %s149, %s150
      %p161 = scmp.eq.s32.totalorder %s30, 0
      %p162 = por %p160, %p161
      %p163 = scmp.ne.s32.totalorder %s149, %s150
      %p164 = scmp.eq.s32.totalorder %s31, 3
      %p165 = por %p163, %p164
      %p167 = scmp.ne.s32.totalorder %s150, %s166
      %p168 = scmp.eq.s32.totalorder %s31, 0
      %p169 = por %p167, %p168
      %s170 = ssub.s32 %s33, %s40
      %p171 = scmp.eq.s32.totalorder %s170, 0
      %s173 = sadd.s32 %s172, 1
      %s174 = scalar_select %p171, %s172, %s173
      %p177 = pneg %p171
      %p178 = scmp.eq.s32.totalorder %s25, 3
      %p179 = por %p177, %p178
      %p180 = scmp.ne.s32.totalorder %s172, %s175
      %p181 = scmp.eq.s32.totalorder %s25, 0
      %p182 = por %p180, %p181
      %p183 = scmp.ne.s32.totalorder %s172, %s175
      %p184 = scmp.eq.s32.totalorder %s30, 3
      %p185 = por %p183, %p184
      %p186 = scmp.ne.s32.totalorder %s175, %s176
      %p187 = scmp.eq.s32.totalorder %s30, 0
      %p188 = por %p186, %p187
      %p189 = scmp.ne.s32.totalorder %s175, %s176
      %p190 = scmp.eq.s32.totalorder %s31, 3
      %p191 = por %p189, %p190
      %p193 = scmp.ne.s32.totalorder %s176, %s192
      %p194 = scmp.eq.s32.totalorder %s31, 0
      %p195 = por %p193, %p194
      %s196 = ssub.s32 %s33, %s40
      %p197 = scmp.eq.s32.totalorder %s196, 0
      %s199 = sadd.s32 %s198, 1
      %s200 = scalar_select %p197, %s198, %s199
      %p203 = pneg %p197
      %p204 = scmp.eq.s32.totalorder %s25, 3
      %p205 = por %p203, %p204
      %p206 = scmp.ne.s32.totalorder %s198, %s201
      %p207 = scmp.eq.s32.totalorder %s25, 0
      %p208 = por %p206, %p207
      %p209 = scmp.ne.s32.totalorder %s198, %s201
      %p210 = scmp.eq.s32.totalorder %s30, 3
      %p211 = por %p209, %p210
      %p212 = scmp.ne.s32.totalorder %s201, %s202
      %p213 = scmp.eq.s32.totalorder %s30, 0
      %p214 = por %p212, %p213
      %p215 = scmp.ne.s32.totalorder %s201, %s202
      %p216 = scmp.eq.s32.totalorder %s31, 3
      %p217 = por %p215, %p216
      %p219 = scmp.ne.s32.totalorder %s202, %s218
      %p220 = scmp.eq.s32.totalorder %s31, 0
      %p221 = por %p219, %p220
      %s222 = ssub.s32 %s33, %s40
      %p223 = scmp.eq.s32.totalorder %s222, 0
      %s225 = sadd.s32 %s224, 1
      %s226 = scalar_select %p223, %s224, %s225
      %p229 = pneg %p223
      %p230 = scmp.eq.s32.totalorder %s25, 3
      %p231 = por %p229, %p230
      %p232 = scmp.ne.s32.totalorder %s224, %s227
      %p233 = scmp.eq.s32.totalorder %s25, 0
      %p234 = por %p232, %p233
      %p235 = scmp.ne.s32.totalorder %s224, %s227
      %p236 = scmp.eq.s32.totalorder %s30, 3
      %p237 = por %p235, %p236
      %p238 = scmp.ne.s32.totalorder %s227, %s228
      %p239 = scmp.eq.s32.totalorder %s30, 0
      %p240 = por %p238, %p239
      %p241 = scmp.ne.s32.totalorder %s227, %s228
      %p242 = scmp.eq.s32.totalorder %s31, 3
      %p243 = por %p241, %p242
      %p245 = scmp.ne.s32.totalorder %s228, %s244
      %p246 = scmp.eq.s32.totalorder %s31, 0
      %p247 = por %p245, %p246
      %s248 = ssub.s32 %s33, %s40
      %p249 = scmp.eq.s32.totalorder %s248, 0
      %s251 = sadd.s32 %s250, 1
      %s252 = scalar_select %p249, %s250, %s251
      %p255 = pneg %p249
      %p256 = scmp.eq.s32.totalorder %s25, 3
      %p257 = por %p255, %p256
      %p258 = scmp.ne.s32.totalorder %s250, %s253
      %p259 = scmp.eq.s32.totalorder %s25, 0
      %p260 = por %p258, %p259
      %p261 = scmp.ne.s32.totalorder %s250, %s253
      %p262 = scmp.eq.s32.totalorder %s30, 3
      %p263 = por %p261, %p262
      %p264 = scmp.ne.s32.totalorder %s253, %s254
      %p265 = scmp.eq.s32.totalorder %s30, 0
      %p266 = por %p264, %p265
      %p267 = scmp.ne.s32.totalorder %s253, %s254
      %p268 = scmp.eq.s32.totalorder %s31, 3
      %p269 = por %p267, %p268
      %p271 = scmp.ne.s32.totalorder %s254, %s270
      %p272 = scmp.eq.s32.totalorder %s31, 0
      %p273 = por %p271, %p272
      %s274 = ssub.s32 %s33, %s40
      %p275 = scmp.eq.s32.totalorder %s274, 0
      %s277 = sadd.s32 %s276, 1
      %s278 = scalar_select %p275, %s276, %s277
      %p281 = pneg %p275
      %p282 = scmp.eq.s32.totalorder %s25, 3
      %p283 = por %p281, %p282
      %p284 = scmp.ne.s32.totalorder %s276, %s279
      %p285 = scmp.eq.s32.totalorder %s25, 0
      %p286 = por %p284, %p285
      %p287 = scmp.ne.s32.totalorder %s276, %s279
      %p288 = scmp.eq.s32.totalorder %s30, 3
      %p289 = por %p287, %p288
      %p290 = scmp.ne.s32.totalorder %s279, %s280
      %p291 = scmp.eq.s32.totalorder %s30, 0
      %p292 = por %p290, %p291
      %p293 = scmp.ne.s32.totalorder %s279, %s280
      %p294 = scmp.eq.s32.totalorder %s31, 3
      %p295 = por %p293, %p294
      %p297 = scmp.ne.s32.totalorder %s280, %s296
      %p298 = scmp.eq.s32.totalorder %s31, 0
      %p299 = por %p297, %p298
      %s300 = ssub.s32 %s33, %s40
      %p301 = scmp.eq.s32.totalorder %s300, 0
      %s303 = sadd.s32 %s302, 1
      %s304 = scalar_select %p301, %s302, %s303
      %p307 = pneg %p301
      %p308 = scmp.eq.s32.totalorder %s25, 3
      %p309 = por %p307, %p308
      %p310 = scmp.ne.s32.totalorder %s302, %s305
      %p311 = scmp.eq.s32.totalorder %s25, 0
      %p312 = por %p310, %p311
      %p313 = scmp.ne.s32.totalorder %s302, %s305
      %p314 = scmp.eq.s32.totalorder %s30, 3
      %p315 = por %p313, %p314
      %p316 = scmp.ne.s32.totalorder %s305, %s306
      %p317 = scmp.eq.s32.totalorder %s30, 0
      %p318 = por %p316, %p317
      %p319 = scmp.ne.s32.totalorder %s305, %s306
      %p320 = scmp.eq.s32.totalorder %s31, 3
      %p321 = por %p319, %p320
      %p323 = scmp.ne.s32.totalorder %s306, %s322
      %p324 = scmp.eq.s32.totalorder %s31, 0
      %p325 = por %p323, %p324
      %s326 = ssub.s32 %s33, %s40
      %p327 = scmp.eq.s32.totalorder %s326, 0
      %s329 = sadd.s32 %s328, 1
      %s330 = scalar_select %p327, %s328, %s329
      %p333 = pneg %p327
      %p334 = scmp.eq.s32.totalorder %s25, 3
      %p335 = por %p333, %p334
      %p336 = scmp.ne.s32.totalorder %s328, %s331
      %p337 = scmp.eq.s32.totalorder %s25, 0
      %p338 = por %p336, %p337
      %p339 = scmp.ne.s32.totalorder %s328, %s331
      %p340 = scmp.eq.s32.totalorder %s30, 3
      %p341 = por %p339, %p340
      %p342 = scmp.ne.s32.totalorder %s331, %s332
      %p343 = scmp.eq.s32.totalorder %s30, 0
      %p344 = por %p342, %p343
      %p345 = scmp.ne.s32.totalorder %s331, %s332
      %p346 = scmp.eq.s32.totalorder %s31, 3
      %p347 = por %p345, %p346
      %p349 = scmp.ne.s32.totalorder %s332, %s348
      %p350 = scmp.eq.s32.totalorder %s31, 0
      %p351 = por %p349, %p350
      %s352 = ssub.s32 %s33, %s40
      %p353 = scmp.eq.s32.totalorder %s352, 0
      %s355 = sadd.s32 %s354, 1
      %s356 = scalar_select %p353, %s354, %s355
      %p359 = pneg %p353
      %p360 = scmp.eq.s32.totalorder %s25, 3
      %p361 = por %p359, %p360
      %p362 = scmp.ne.s32.totalorder %s354, %s357
      %p363 = scmp.eq.s32.totalorder %s25, 0
      %p364 = por %p362, %p363
      %p365 = scmp.ne.s32.totalorder %s354, %s357
      %p366 = scmp.eq.s32.totalorder %s30, 3
      %p367 = por %p365, %p366
      %p368 = scmp.ne.s32.totalorder %s357, %s358
      %p369 = scmp.eq.s32.totalorder %s30, 0
      %p370 = por %p368, %p369
      %p371 = scmp.ne.s32.totalorder %s357, %s358
      %p372 = scmp.eq.s32.totalorder %s31, 3
      %p373 = por %p371, %p372
      %p375 = scmp.ne.s32.totalorder %s358, %s374
      %p376 = scmp.eq.s32.totalorder %s31, 0
      %p377 = por %p375, %p376
      %s378 = ssub.s32 %s33, %s40
      %p379 = scmp.eq.s32.totalorder %s378, 0
      %s381 = sadd.s32 %s380, 1
      %s382 = scalar_select %p379, %s380, %s381
      %p385 = pneg %p379
      %p386 = scmp.eq.s32.totalorder %s25, 3
      %p387 = por %p385, %p386
      %p388 = scmp.ne.s32.totalorder %s380, %s383
      %p389 = scmp.eq.s32.totalorder %s25, 0
      %p390 = por %p388, %p389
      %p391 = scmp.ne.s32.totalorder %s380, %s383
      %p392 = scmp.eq.s32.totalorder %s30, 3
      %p393 = por %p391, %p392
      %p394 = scmp.ne.s32.totalorder %s383, %s384
      %p395 = scmp.eq.s32.totalorder %s30, 0
      %p396 = por %p394, %p395
      %p397 = scmp.ne.s32.totalorder %s383, %s384
      %p398 = scmp.eq.s32.totalorder %s31, 3
      %p399 = por %p397, %p398
      %p401 = scmp.ne.s32.totalorder %s384, %s400
      %p402 = scmp.eq.s32.totalorder %s31, 0
      %p403 = por %p401, %p402
      %s405 = sadd.s32 %s404, 1
      %p408 = scmp.eq.s32.totalorder %s25, 3
      %p409 = scmp.ne.s32.totalorder %s404, %s406
      %p410 = scmp.eq.s32.totalorder %s25, 0
      %p411 = por %p409, %p410
      %p412 = scmp.ne.s32.totalorder %s404, %s406
      %p413 = scmp.eq.s32.totalorder %s30, 3
      %p414 = por %p412, %p413
      %p415 = scmp.ne.s32.totalorder %s406, %s407
      %p416 = scmp.eq.s32.totalorder %s30, 0
      %p417 = por %p415, %p416
      %p418 = scmp.ne.s32.totalorder %s406, %s407
      %p419 = scmp.eq.s32.totalorder %s31, 3
      %p420 = por %p418, %p419
      %p422 = scmp.ne.s32.totalorder %s407, %s421
      %p423 = scmp.eq.s32.totalorder %s31, 0
      %p424 = por %p422, %p423
      %s426 = sadd.s32 %s425, 1
      %p429 = scmp.eq.s32.totalorder %s25, 3
      %p430 = scmp.ne.s32.totalorder %s425, %s427
      %p431 = scmp.eq.s32.totalorder %s25, 0
      %p432 = por %p430, %p431
      %p433 = scmp.ne.s32.totalorder %s425, %s427
      %p434 = scmp.eq.s32.totalorder %s30, 3
      %p435 = por %p433, %p434
      %p436 = scmp.ne.s32.totalorder %s427, %s428
      %p437 = scmp.eq.s32.totalorder %s30, 0
      %p438 = por %p436, %p437
      %p439 = scmp.ne.s32.totalorder %s427, %s428
      %p440 = scmp.eq.s32.totalorder %s31, 3
      %p441 = por %p439, %p440
      %p443 = scmp.ne.s32.totalorder %s428, %s442
      %p444 = scmp.eq.s32.totalorder %s31, 0
      %p445 = por %p443, %p444
      %s446 = ssub.s32 %s32, %s44
      %p447 = scmp.eq.s32.totalorder %s446, 0
      %s449 = sadd.s32 %s448, 1
      %s450 = scalar_select %p447, %s448, %s449
      %p453 = pneg %p447
      %p454 = scmp.eq.s32.totalorder %s25, 3
      %p455 = por %p453, %p454
      %p456 = scmp.ne.s32.totalorder %s448, %s451
      %p457 = scmp.eq.s32.totalorder %s25, 0
      %p458 = por %p456, %p457
      %p459 = scmp.ne.s32.totalorder %s448, %s451
      %p460 = scmp.eq.s32.totalorder %s30, 3
      %p461 = por %p459, %p460
      %p462 = scmp.ne.s32.totalorder %s451, %s452
      %p463 = scmp.eq.s32.totalorder %s30, 0
      %p464 = por %p462, %p463
      %p465 = scmp.ne.s32.totalorder %s451, %s452
      %p466 = scmp.eq.s32.totalorder %s31, 3
      %p467 = por %p465, %p466
      %p469 = scmp.ne.s32.totalorder %s452, %s468
      %p470 = scmp.eq.s32.totalorder %s31, 0
      %p471 = por %p469, %p470
      %p472 = scmp.le.s32.totalorder 1, %s25
      %p473 = scmp.lt.s32.totalorder %s25, 5
      %p474 = pnand %p472, %p473
      %p475 = pneg %p474
      // Predicated region
      $region9: #{tpu_custom_call.1} parent=5 // pred_check
        _
      $region10: #{tpu_custom_call.1} parent=5 // pred_check_branch
        %477 = sbr.rel (%p474) target = $region12
      $region11: #{tpu_custom_call.1} parent=5 // pred_region
        %s478 = ssub.s32 %s25, 1
        // Predicated region
        $region13: #{tpu_custom_call.1} parent=11 // pred_check
          %p479 = pneg %p84
        $region14: #{tpu_custom_call.1} parent=11 // pred_check_branch
          %481 = sbr.rel (%p479) target = $region16
        $region15: #{tpu_custom_call.1} parent=11 // pred_region
          _
        $region16: #{tpu_custom_call.1} parent=11 // pred_fallthru
          _
        // Predicated region
        $region17: #{tpu_custom_call.1} parent=11 // pred_check
          %p482 = pneg %p417
        $region18: #{tpu_custom_call.1} parent=11 // pred_check_branch
          %484 = sbr.rel (%p482) target = $region20
        $region19: #{tpu_custom_call.1} parent=11 // pred_region
          _
        $region20: #{tpu_custom_call.1} parent=11 // pred_fallthru
          _
        // Predicated region
        $region21: #{tpu_custom_call.1} parent=11 // pred_check
          %p485 = pneg %p438
        $region22: #{tpu_custom_call.1} parent=11 // pred_check_branch
          %487 = sbr.rel (%p485) target = $region24
        $region23: #{tpu_custom_call.1} parent=11 // pred_region
          _
        $region24: #{tpu_custom_call.1} parent=11 // pred_fallthru
          _
      $region12: #{tpu_custom_call.1} parent=5 // pred_fallthru
        _
      %p488 = scmp.lt.s32.totalorder %s25, 4
      // Predicated region
      $region25: #{tpu_custom_call.1} parent=5 // pred_check
        %p489 = pneg %p488
      $region26: #{tpu_custom_call.1} parent=5 // pred_check_branch
        %491 = sbr.rel (%p489) target = $region28
      $region27: #{tpu_custom_call.1} parent=5 // pred_region
        // Predicated region
        $region29: #{tpu_custom_call.1} parent=27 // pred_check
          %p492 = pneg %p57
        $region30: #{tpu_custom_call.1} parent=27 // pred_check_branch
          %494 = sbr.rel (%p492) target = $region32
        $region31: #{tpu_custom_call.1} parent=27 // pred_region
          %p495 = scmp.lt.s32.totalorder %s32, 1
          %s496 = scalar_select %p495, %s32, 1
          %s497 = smul.addr %s496, 8
          %s498 = scalar_lea.vmem %s0, %s497
        $region32: #{tpu_custom_call.1} parent=27 // pred_fallthru
          _
        // Predicated region
        $region33: #{tpu_custom_call.1} parent=27 // pred_check
          %p499 = pneg %p104
        $region34: #{tpu_custom_call.1} parent=27 // pred_check_branch
          %501 = sbr.rel (%p499) target = $region36
        $region35: #{tpu_custom_call.1} parent=27 // pred_region
          %p502 = scmp.lt.s32.totalorder %s33, 1
          %s503 = scalar_select %p502, %s33, 1
          %s504 = smul.addr %s503, 8
          %s505 = smul.addr %s504, 8
          %s506 = scalar_lea.vmem %s2, %s505
        $region36: #{tpu_custom_call.1} parent=27 // pred_fallthru
          _
        // Predicated region
        $region37: #{tpu_custom_call.1} parent=27 // pred_check
          %p507 = pneg %p130
        $region38: #{tpu_custom_call.1} parent=27 // pred_check_branch
          %509 = sbr.rel (%p507) target = $region40
        $region39: #{tpu_custom_call.1} parent=27 // pred_region
          %p510 = scmp.lt.s32.totalorder %s33, 1
          %s511 = scalar_select %p510, %s33, 1
          %s512 = smul.addr %s511, 8
          %s513 = smul.addr %s512, 8
          %s514 = scalar_lea.vmem %s3, %s513
        $region40: #{tpu_custom_call.1} parent=27 // pred_fallthru
          _
        // Predicated region
        $region41: #{tpu_custom_call.1} parent=27 // pred_check
          %p515 = pneg %p156
        $region42: #{tpu_custom_call.1} parent=27 // pred_check_branch
          %517 = sbr.rel (%p515) target = $region44
        $region43: #{tpu_custom_call.1} parent=27 // pred_region
          %p518 = scmp.lt.s32.totalorder %s33, 1
          %s519 = scalar_select %p518, %s33, 1
          %s520 = smul.addr %s519, 8
          %s521 = smul.addr %s520, 8
          %s522 = scalar_lea.vmem %s4, %s521
        $region44: #{tpu_custom_call.1} parent=27 // pred_fallthru
          _
        // Predicated region
        $region45: #{tpu_custom_call.1} parent=27 // pred_check
          %p523 = pneg %p182
        $region46: #{tpu_custom_call.1} parent=27 // pred_check_branch
          %525 = sbr.rel (%p523) target = $region48
        $region47: #{tpu_custom_call.1} parent=27 // pred_region
          %p526 = scmp.lt.s32.totalorder %s33, 1
          %s527 = scalar_select %p526, %s33, 1
          %s528 = smul.addr %s527, 4
          %s529 = smul.addr %s528, 8
          %s530 = scalar_lea.vmem %s5, %s529
        $region48: #{tpu_custom_call.1} parent=27 // pred_fallthru
          _
        // Predicated region
        $region49: #{tpu_custom_call.1} parent=27 // pred_check
          %p531 = pneg %p208
        $region50: #{tpu_custom_call.1} parent=27 // pred_check_branch
          %533 = sbr.rel (%p531) target = $region52
        $region51: #{tpu_custom_call.1} parent=27 // pred_region
          %p534 = scmp.lt.s32.totalorder %s33, 1
          %s535 = scalar_select %p534, %s33, 1
          %s536 = scalar_lea.vmem %s6, %s535
        $region52: #{tpu_custom_call.1} parent=27 // pred_fallthru
          _
        // Predicated region
        $region53: #{tpu_custom_call.1} parent=27 // pred_check
          %p537 = pneg %p234
        $region54: #{tpu_custom_call.1} parent=27 // pred_check_branch
          %539 = sbr.rel (%p537) target = $region56
        $region55: #{tpu_custom_call.1} parent=27 // pred_region
          %p540 = scmp.lt.s32.totalorder %s33, 1
          %s541 = scalar_select %p540, %s33, 1
          %s542 = scalar_lea.vmem %s7, %s541
        $region56: #{tpu_custom_call.1} parent=27 // pred_fallthru
          _
        // Predicated region
        $region57: #{tpu_custom_call.1} parent=27 // pred_check
          %p543 = pneg %p260
        $region58: #{tpu_custom_call.1} parent=27 // pred_check_branch
          %545 = sbr.rel (%p543) target = $region60
        $region59: #{tpu_custom_call.1} parent=27 // pred_region
          %p546 = scmp.lt.s32.totalorder %s33, 1
          %s547 = scalar_select %p546, %s33, 1
          %s548 = scalar_lea.vmem %s8, %s547
        $region60: #{tpu_custom_call.1} parent=27 // pred_fallthru
          _
        // Predicated region
        $region61: #{tpu_custom_call.1} parent=27 // pred_check
          %p549 = pneg %p286
        $region62: #{tpu_custom_call.1} parent=27 // pred_check_branch
          %551 = sbr.rel (%p549) target = $region64
        $region63: #{tpu_custom_call.1} parent=27 // pred_region
          %p552 = scmp.lt.s32.totalorder %s33, 1
          %s553 = scalar_select %p552, %s33, 1
          %s554 = scalar_lea.vmem %s9, %s553
        $region64: #{tpu_custom_call.1} parent=27 // pred_fallthru
          _
        // Predicated region
        $region65: #{tpu_custom_call.1} parent=27 // pred_check
          %p555 = pneg %p312
        $region66: #{tpu_custom_call.1} parent=27 // pred_check_branch
          %557 = sbr.rel (%p555) target = $region68
        $region67: #{tpu_custom_call.1} parent=27 // pred_region
          %p558 = scmp.lt.s32.totalorder %s33, 1
          %s559 = scalar_select %p558, %s33, 1
          %s560 = smul.addr %s559, 4
          %s561 = smul.addr %s560, 8
          %s562 = scalar_lea.vmem %s10, %s561
        $region68: #{tpu_custom_call.1} parent=27 // pred_fallthru
          _
        // Predicated region
        $region69: #{tpu_custom_call.1} parent=27 // pred_check
          %p563 = pneg %p338
        $region70: #{tpu_custom_call.1} parent=27 // pred_check_branch
          %565 = sbr.rel (%p563) target = $region72
        $region71: #{tpu_custom_call.1} parent=27 // pred_region
          %p566 = scmp.lt.s32.totalorder %s33, 1
          %s567 = scalar_select %p566, %s33, 1
          %s568 = scalar_lea.vmem %s11, %s567
        $region72: #{tpu_custom_call.1} parent=27 // pred_fallthru
          _
        // Predicated region
        $region73: #{tpu_custom_call.1} parent=27 // pred_check
          %p569 = pneg %p364
        $region74: #{tpu_custom_call.1} parent=27 // pred_check_branch
          %571 = sbr.rel (%p569) target = $region76
        $region75: #{tpu_custom_call.1} parent=27 // pred_region
          %p572 = scmp.lt.s32.totalorder %s33, 1
          %s573 = scalar_select %p572, %s33, 1
          %s574 = smul.addr %s573, 8
          %s575 = smul.addr %s574, 8
          %s576 = scalar_lea.vmem %s12, %s575
        $region76: #{tpu_custom_call.1} parent=27 // pred_fallthru
          _
        // Predicated region
        $region77: #{tpu_custom_call.1} parent=27 // pred_check
          %p577 = pneg %p390
        $region78: #{tpu_custom_call.1} parent=27 // pred_check_branch
          %579 = sbr.rel (%p577) target = $region80
        $region79: #{tpu_custom_call.1} parent=27 // pred_region
          %p580 = scmp.lt.s32.totalorder %s33, 1
          %s581 = scalar_select %p580, %s33, 1
          %s582 = scalar_lea.vmem %s13, %s581
        $region80: #{tpu_custom_call.1} parent=27 // pred_fallthru
          _
      $region28: #{tpu_custom_call.1} parent=5 // pred_fallthru
        _
      %p583 = scmp.le.s32.totalorder 1, %s25
      %p584 = scmp.lt.s32.totalorder %s25, 5
      %p585 = pnand %p583, %p584
      %p586 = pneg %p585
      // Predicated region
      $region81: #{tpu_custom_call.1} parent=5 // pred_check
        _
      $region82: #{tpu_custom_call.1} parent=5 // pred_check_branch
        %588 = sbr.rel (%p585) target = $region84
      $region83: #{tpu_custom_call.1} parent=5 // pred_region
        %s589 = ssub.s32 %s25, 1
        %p590 = scmp.lt.s32.totalorder %s34, 1
        %s591 = scalar_select %p590, %s34, 1
        %s592 = smul.addr %s591, 8
        %s593 = scalar_lea.vmem %s0, %s592
        %p594 = pneg %p63
        %p595 = pneg %p60
        %p596 = pneg %p84
        %p597 = pneg %p81
        %p598 = scmp.lt.s32.totalorder %s35, 1
        %s599 = scalar_select %p598, %s35, 1
        %s600 = smul.addr %s599, 8
        %s601 = smul.addr %s600, 8
        %s602 = scalar_lea.vmem %s2, %s601
        %p603 = pneg %p110
        %p604 = pneg %p107
        %p605 = scmp.lt.s32.totalorder %s35, 1
        %s606 = scalar_select %p605, %s35, 1
        %s607 = smul.addr %s606, 8
        %s608 = smul.addr %s607, 8
        %s609 = scalar_lea.vmem %s3, %s608
        %p610 = pneg %p136
        %p611 = pneg %p133
        %p612 = scmp.lt.s32.totalorder %s35, 1
        %s613 = scalar_select %p612, %s35, 1
        %s614 = smul.addr %s613, 8
        %s615 = smul.addr %s614, 8
        %s616 = scalar_lea.vmem %s4, %s615
        %p617 = pneg %p162
        %p618 = pneg %p159
        %p619 = scmp.lt.s32.totalorder %s35, 1
        %s620 = scalar_select %p619, %s35, 1
        %s621 = smul.addr %s620, 4
        %s622 = smul.addr %s621, 8
        %s623 = scalar_lea.vmem %s5, %s622
        %p624 = pneg %p188
        %p625 = pneg %p185
        %p626 = scmp.lt.s32.totalorder %s35, 1
        %s627 = scalar_select %p626, %s35, 1
        %s628 = scalar_lea.vmem %s6, %s627
        %p629 = pneg %p214
        %p630 = pneg %p211
        %p631 = scmp.lt.s32.totalorder %s35, 1
        %s632 = scalar_select %p631, %s35, 1
        %s633 = scalar_lea.vmem %s7, %s632
        %p634 = pneg %p240
        %p635 = pneg %p237
        %p636 = scmp.lt.s32.totalorder %s35, 1
        %s637 = scalar_select %p636, %s35, 1
        %s638 = scalar_lea.vmem %s8, %s637
        %p639 = pneg %p266
        %p640 = pneg %p263
        %p641 = scmp.lt.s32.totalorder %s35, 1
        %s642 = scalar_select %p641, %s35, 1
        %s643 = scalar_lea.vmem %s9, %s642
        %p644 = pneg %p292
        %p645 = pneg %p289
        %p646 = scmp.lt.s32.totalorder %s35, 1
        %s647 = scalar_select %p646, %s35, 1
        %s648 = smul.addr %s647, 4
        %s649 = smul.addr %s648, 8
        %s650 = scalar_lea.vmem %s10, %s649
        %p651 = pneg %p318
        %p652 = pneg %p315
        %p653 = scmp.lt.s32.totalorder %s35, 1
        %s654 = scalar_select %p653, %s35, 1
        %s655 = scalar_lea.vmem %s11, %s654
        %p656 = pneg %p344
        %p657 = pneg %p341
        %p658 = scmp.lt.s32.totalorder %s35, 1
        %s659 = scalar_select %p658, %s35, 1
        %s660 = smul.addr %s659, 8
        %s661 = smul.addr %s660, 8
        %s662 = scalar_lea.vmem %s12, %s661
        %p663 = pneg %p370
        %p664 = pneg %p367
        %p665 = scmp.lt.s32.totalorder %s35, 1
        %s666 = scalar_select %p665, %s35, 1
        %s667 = scalar_lea.vmem %s13, %s666
        %p668 = pneg %p396
        %p669 = pneg %p393
        %p670 = pneg %p417
        %p671 = pneg %p414
        %p672 = pneg %p438
        %p673 = pneg %p435
        %p674 = pneg %p464
        %p675 = pneg %p461
        %s676 = sand.u32 %s451, 1
        %s677 = scalar_lea.sflag [#allocation4], %s676
        %s678 = sand.u32 %s451, 1
        %s679 = smul.addr %s678, 8
        %s680 = scalar_lea.vmem [#allocation3], %s679
        %p681 = scmp.lt.s32.totalorder %s34, 1
        %s682 = scalar_select %p681, %s34, 1
        %s683 = smul.addr %s682, 8
        %s684 = scalar_lea.vmem %s0, %s683
        %p685 = scmp.lt.s32.totalorder %s35, 1
        %s686 = scalar_select %p685, %s35, 1
        %s687 = smul.addr %s686, 8
        %s688 = smul.addr %s687, 8
        %s689 = scalar_lea.vmem %s2, %s688
        %p690 = scmp.lt.s32.totalorder %s35, 1
        %s691 = scalar_select %p690, %s35, 1
        %s692 = smul.addr %s691, 8
        %s693 = smul.addr %s692, 8
        %s694 = scalar_lea.vmem %s3, %s693
        %p695 = scmp.lt.s32.totalorder %s35, 1
        %s696 = scalar_select %p695, %s35, 1
        %s697 = smul.addr %s696, 8
        %s698 = smul.addr %s697, 8
        %s699 = scalar_lea.vmem %s4, %s698
        %p700 = scmp.lt.s32.totalorder %s35, 1
        %s701 = scalar_select %p700, %s35, 1
        %s702 = smul.addr %s701, 4
        %s703 = smul.addr %s702, 8
        %s704 = scalar_lea.vmem %s5, %s703
        %p705 = scmp.lt.s32.totalorder %s35, 1
        %s706 = scalar_select %p705, %s35, 1
        %s707 = scalar_lea.vmem %s6, %s706
        %p708 = scmp.lt.s32.totalorder %s35, 1
        %s709 = scalar_select %p708, %s35, 1
        %s710 = scalar_lea.vmem %s7, %s709
        %p711 = scmp.lt.s32.totalorder %s35, 1
        %s712 = scalar_select %p711, %s35, 1
        %s713 = scalar_lea.vmem %s8, %s712
        %p714 = scmp.lt.s32.totalorder %s35, 1
        %s715 = scalar_select %p714, %s35, 1
        %s716 = scalar_lea.vmem %s9, %s715
        %p717 = scmp.lt.s32.totalorder %s35, 1
        %s718 = scalar_select %p717, %s35, 1
        %s719 = smul.addr %s718, 4
        %s720 = smul.addr %s719, 8
        %s721 = scalar_lea.vmem %s10, %s720
        %p722 = scmp.lt.s32.totalorder %s35, 1
        %s723 = scalar_select %p722, %s35, 1
        %s724 = scalar_lea.vmem %s11, %s723
        %p725 = scmp.lt.s32.totalorder %s35, 1
        %s726 = scalar_select %p725, %s35, 1
        %s727 = smul.addr %s726, 8
        %s728 = smul.addr %s727, 8
        %s729 = scalar_lea.vmem %s12, %s728
        %p730 = scmp.lt.s32.totalorder %s35, 1
        %s731 = scalar_select %p730, %s35, 1
        %s732 = scalar_lea.vmem %s13, %s731
        %p733 = scmp.eq.s32.totalorder %s35, 0
        // Predicated region
        $region85: #{tpu_custom_call.1} parent=83 // pred_check
          %p734 = pneg %p733
        $region86: #{tpu_custom_call.1} parent=83 // pred_check_branch
          %736 = sbr.rel (%p734) target = $region88
        $region87: #{tpu_custom_call.1} parent=83 // pred_region
          %v737 = vld [vmem:[%s684] sm:$0xff]
          %vm738 = vcmask 261120
          %739 = vst.msk [vmem:[#allocation2] sm:$0xff] %vm738, %v737
        $region88: #{tpu_custom_call.1} parent=83 // pred_fallthru
          _
        %v740 = vld [vmem:[#allocation2] sm:$0xff]
        %v741 = vld [vmem:[%s707] sm:$0x1]
        %v742 = vld [vmem:[%s710] sm:$0x1]
        %vm743 = vcmask 261120
        %v744 = vsel %vm743, %v740, 0.0
        %745 = vadd.xlane.f32.xlu0 %v744
        %v746 = vpop.xlane.xlu0 %745
        %v747 = vrcp.pop 32.0
        %v748 = vmul.f32 %v746, %v747
        %v749 = vsub.f32 %v740, %v748
        %v750 = vmul.f32 %v749, %v749
        %v751 = vsel %vm743, %v750, 0.0
        %752 = vadd.xlane.f32.xlu0 %v751
        %v753 = vpop.xlane.xlu0 %752
        %v754 = vmul.f32 %v753, %v747
        %v755 = vadd.f32 %v754, 1e-05
        %v756 = vrsqrt.pop %v755
        %v757 = vmul.f32 %v749, %v756
        %v759 = vlaneseq
        %v760 = vshrl.u32 %v759, 7
        %v761 = vsub.s32 0, %v760
        %v762 = vrot.slane %v741, %v761
        %v764 = vmul.f32 %v757, %v762
        %v766 = vlaneseq
        %v767 = vshrl.u32 %v766, 7
        %v768 = vsub.s32 0, %v767
        %v769 = vrot.slane %v742, %v768
        %v771 = vadd.f32 %v764, %v769
        %v772 = vld [vmem:[%s689] sm:$0xff]
        %v773 = vld [vmem:[%s689 + $0x8] sm:$0xff]
        %v774 = vld [vmem:[%s689 + $0x10] sm:$0xff]
        %v775 = vld [vmem:[%s689 + $0x18] sm:$0xff]
        %v776 = vld [vmem:[%s689 + $0x20] sm:$0xff]
        %v777 = vld [vmem:[%s689 + $0x28] sm:$0xff]
        %v778 = vld [vmem:[%s689 + $0x30] sm:$0xff]
        %v779 = vld [vmem:[%s689 + $0x38] sm:$0xff]
        %v781 = vsel %vm743, %v771, 0
        %783 = vmatprep.subr.mxu0 0.0
        %784 = vmatpush1.msra.mxu0 %v772
        %785 = vmatprep.subr.mxu0 0.0
        %786 = vmatpush1.msra.mxu0 %v773
        %787 = vmatprep.subr.mxu0 0.0
        %788 = vmatpush1.msra.mxu0 %v774
        %789 = vmatprep.subr.mxu0 0.0
        %790 = vmatpush1.msra.mxu0 %v775
        %791 = vmatprep.subr.mxu0 0.0
        %792 = vmatpush1.msra.mxu0 0.0
        %793 = vmatprep.subr.mxu0 0.0
        %794 = vmatpush1.msra.mxu0 0.0
        %795 = vmatprep.subr.mxu0 0.0
        %796 = vmatpush1.msra.mxu0 0.0
        %797 = vmatprep.subr.mxu0 0.0
        %798 = vmatpush1.msra.mxu0 0.0
        %799 = vmatprep.subr.mxu0 0.0
        %800 = vmatpush1.msra.mxu0 0.0
        %801 = vmatprep.subr.mxu0 0.0
        %802 = vmatpush1.msra.mxu0 0.0
        %803 = vmatprep.subr.mxu0 0.0
        %804 = vmatpush1.msra.mxu0 0.0
        %805 = vmatprep.subr.mxu0 0.0
        %806 = vmatpush1.msra.mxu0 0.0
        %807 = vmatprep.subr.mxu0 0.0
        %808 = vmatpush1.msra.mxu0 0.0
        %809 = vmatprep.subr.mxu0 0.0
        %810 = vmatpush1.msra.mxu0 0.0
        %811 = vmatprep.subr.mxu0 0.0
        %812 = vmatpush1.msra.mxu0 0.0
        %813 = vmatprep.subr.mxu0 0.0
        %814 = vmatpush1.msra.mxu0 0.0
        %815 = vmatprep.subr.mxu0 0.0
        %816 = vmatpush1.msra.mxu0 0.0
        %817 = vmatprep.subr.mxu0 0.0
        %818 = vmatpush1.msra.mxu0 0.0
        %819 = vmatprep.subr.mxu0 0.0
        %820 = vmatpush1.msra.mxu0 0.0
        %821 = vmatprep.subr.mxu0 0.0
        %822 = vmatpush1.msra.mxu0 0.0
        %823 = vmatprep.subr.mxu0 0.0
        %824 = vmatpush1.msra.mxu0 0.0
        %825 = vmatprep.subr.mxu0 0.0
        %826 = vmatpush1.msra.mxu0 0.0
        %827 = vmatprep.subr.mxu0 0.0
        %828 = vmatpush1.msra.mxu0 0.0
        %829 = vmatprep.subr.mxu0 0.0
        %830 = vmatpush1.msra.mxu0 0.0
        %831 = vmatprep.subr.mxu0 0.0
        %832 = vmatpush1.msra.mxu0 0.0
        %833 = vmatprep.subr.mxu0 0.0
        %834 = vmatpush1.msra.mxu0 0.0
        %835 = vmatprep.subr.mxu0 0.0
        %836 = vmatpush1.msra.mxu0 0.0
        %837 = vmatprep.subr.mxu0 0.0
        %838 = vmatpush1.msra.mxu0 0.0
        %839 = vmatprep.subr.mxu0 0.0
        %840 = vmatpush1.msra.mxu0 0.0
        %841 = vmatprep.subr.mxu0 0.0
        %842 = vmatpush1.msra.mxu0 0.0
        %843 = vmatprep.subr.mxu0 0.0
        %844 = vmatpush1.msra.mxu0 0.0
        %845 = vmatprep.subr.mxu0 0.0
        %846 = vmatpush1.msra.mxu0 0.0
        %847 = vmatprep.mubr.f32.mxu0 0.0
        %848 = vmatmul.mubr.f32.gmra.mrb[0].mxu0 %v781
        %v849 = vpop.f32.mrb[0].mxu0
        %v850 = vadd.f32 0.0, %v849
        %v851 = vpop.f32.mrb[0].mxu0
        %852 = vdwg.mxu0
        %853 = vmatprep.subr.mxu0 0.0
        %854 = vmatpush1.msra.mxu0 %v776
        %855 = vmatprep.subr.mxu0 0.0
        %856 = vmatpush1.msra.mxu0 %v777
        %857 = vmatprep.subr.mxu0 0.0
        %858 = vmatpush1.msra.mxu0 %v778
        %859 = vmatprep.subr.mxu0 0.0
        %860 = vmatpush1.msra.mxu0 %v779
        %861 = vmatprep.subr.mxu0 0.0
        %862 = vmatpush1.msra.mxu0 0.0
        %863 = vmatprep.subr.mxu0 0.0
        %864 = vmatpush1.msra.mxu0 0.0
        %865 = vmatprep.subr.mxu0 0.0
        %866 = vmatpush1.msra.mxu0 0.0
        %867 = vmatprep.subr.mxu0 0.0
        %868 = vmatpush1.msra.mxu0 0.0
        %869 = vmatprep.subr.mxu0 0.0
        %870 = vmatpush1.msra.mxu0 0.0
        %871 = vmatprep.subr.mxu0 0.0
        %872 = vmatpush1.msra.mxu0 0.0
        %873 = vmatprep.subr.mxu0 0.0
        %874 = vmatpush1.msra.mxu0 0.0
        %875 = vmatprep.subr.mxu0 0.0
        %876 = vmatpush1.msra.mxu0 0.0
        %877 = vmatprep.subr.mxu0 0.0
        %878 = vmatpush1.msra.mxu0 0.0
        %879 = vmatprep.subr.mxu0 0.0
        %880 = vmatpush1.msra.mxu0 0.0
        %881 = vmatprep.subr.mxu0 0.0
        %882 = vmatpush1.msra.mxu0 0.0
        %883 = vmatprep.subr.mxu0 0.0
        %884 = vmatpush1.msra.mxu0 0.0
        %885 = vmatprep.subr.mxu0 0.0
        %886 = vmatpush1.msra.mxu0 0.0
        %887 = vmatprep.subr.mxu0 0.0
        %888 = vmatpush1.msra.mxu0 0.0
        %889 = vmatprep.subr.mxu0 0.0
        %890 = vmatpush1.msra.mxu0 0.0
        %891 = vmatprep.subr.mxu0 0.0
        %892 = vmatpush1.msra.mxu0 0.0
        %893 = vmatprep.subr.mxu0 0.0
        %894 = vmatpush1.msra.mxu0 0.0
        %895 = vmatprep.subr.mxu0 0.0
        %896 = vmatpush1.msra.mxu0 0.0
        %897 = vmatprep.subr.mxu0 0.0
        %898 = vmatpush1.msra.mxu0 0.0
        %899 = vmatprep.subr.mxu0 0.0
        %900 = vmatpush1.msra.mxu0 0.0
        %901 = vmatprep.subr.mxu0 0.0
        %902 = vmatpush1.msra.mxu0 0.0
        %903 = vmatprep.subr.mxu0 0.0
        %904 = vmatpush1.msra.mxu0 0.0
        %905 = vmatprep.subr.mxu0 0.0
        %906 = vmatpush1.msra.mxu0 0.0
        %907 = vmatprep.subr.mxu0 0.0
        %908 = vmatpush1.msra.mxu0 0.0
        %909 = vmatprep.subr.mxu0 0.0
        %910 = vmatpush1.msra.mxu0 0.0
        %911 = vmatprep.subr.mxu0 0.0
        %912 = vmatpush1.msra.mxu0 0.0
        %913 = vmatprep.subr.mxu0 0.0
        %914 = vmatpush1.msra.mxu0 0.0
        %915 = vmatprep.subr.mxu0 0.0
        %916 = vmatpush1.msra.mxu0 0.0
        %917 = vmatprep.mubr.f32.mxu0 0.0
        %918 = vmatmul.mubr.f32.gmra.mrb[0].mxu0 %v781
        %v919 = vpop.f32.mrb[0].mxu0
        %v920 = vadd.f32 0.0, %v919
        %v921 = vpop.f32.mrb[0].mxu0
        %922 = vdwg.mxu0
        %v923 = vld [vmem:[%s694] sm:$0xff]
        %v924 = vld [vmem:[%s694 + $0x8] sm:$0xff]
        %v925 = vld [vmem:[%s694 + $0x10] sm:$0xff]
        %v926 = vld [vmem:[%s694 + $0x18] sm:$0xff]
        %v927 = vld [vmem:[%s694 + $0x20] sm:$0xff]
        %v928 = vld [vmem:[%s694 + $0x28] sm:$0xff]
        %v929 = vld [vmem:[%s694 + $0x30] sm:$0xff]
        %v930 = vld [vmem:[%s694 + $0x38] sm:$0xff]
        %931 = vmatprep.subr.mxu0 0.0
        %932 = vmatpush1.msra.mxu0 %v923
        %933 = vmatprep.subr.mxu0 0.0
        %934 = vmatpush1.msra.mxu0 %v924
        %935 = vmatprep.subr.mxu0 0.0
        %936 = vmatpush1.msra.mxu0 %v925
        %937 = vmatprep.subr.mxu0 0.0
        %938 = vmatpush1.msra.mxu0 %v926
        %939 = vmatprep.subr.mxu0 0.0
        %940 = vmatpush1.msra.mxu0 0.0
        %941 = vmatprep.subr.mxu0 0.0
        %942 = vmatpush1.msra.mxu0 0.0
        %943 = vmatprep.subr.mxu0 0.0
        %944 = vmatpush1.msra.mxu0 0.0
        %945 = vmatprep.subr.mxu0 0.0
        %946 = vmatpush1.msra.mxu0 0.0
        %947 = vmatprep.subr.mxu0 0.0
        %948 = vmatpush1.msra.mxu0 0.0
        %949 = vmatprep.subr.mxu0 0.0
        %950 = vmatpush1.msra.mxu0 0.0
        %951 = vmatprep.subr.mxu0 0.0
        %952 = vmatpush1.msra.mxu0 0.0
        %953 = vmatprep.subr.mxu0 0.0
        %954 = vmatpush1.msra.mxu0 0.0
        %955 = vmatprep.subr.mxu0 0.0
        %956 = vmatpush1.msra.mxu0 0.0
        %957 = vmatprep.subr.mxu0 0.0
        %958 = vmatpush1.msra.mxu0 0.0
        %959 = vmatprep.subr.mxu0 0.0
        %960 = vmatpush1.msra.mxu0 0.0
        %961 = vmatprep.subr.mxu0 0.0
        %962 = vmatpush1.msra.mxu0 0.0
        %963 = vmatprep.subr.mxu0 0.0
        %964 = vmatpush1.msra.mxu0 0.0
        %965 = vmatprep.subr.mxu0 0.0
        %966 = vmatpush1.msra.mxu0 0.0
        %967 = vmatprep.subr.mxu0 0.0
        %968 = vmatpush1.msra.mxu0 0.0
        %969 = vmatprep.subr.mxu0 0.0
        %970 = vmatpush1.msra.mxu0 0.0
        %971 = vmatprep.subr.mxu0 0.0
        %972 = vmatpush1.msra.mxu0 0.0
        %973 = vmatprep.subr.mxu0 0.0
        %974 = vmatpush1.msra.mxu0 0.0
        %975 = vmatprep.subr.mxu0 0.0
        %976 = vmatpush1.msra.mxu0 0.0
        %977 = vmatprep.subr.mxu0 0.0
        %978 = vmatpush1.msra.mxu0 0.0
        %979 = vmatprep.subr.mxu0 0.0
        %980 = vmatpush1.msra.mxu0 0.0
        %981 = vmatprep.subr.mxu0 0.0
        %982 = vmatpush1.msra.mxu0 0.0
        %983 = vmatprep.subr.mxu0 0.0
        %984 = vmatpush1.msra.mxu0 0.0
        %985 = vmatprep.subr.mxu0 0.0
        %986 = vmatpush1.msra.mxu0 0.0
        %987 = vmatprep.subr.mxu0 0.0
        %988 = vmatpush1.msra.mxu0 0.0
        %989 = vmatprep.subr.mxu0 0.0
        %990 = vmatpush1.msra.mxu0 0.0
        %991 = vmatprep.subr.mxu0 0.0
        %992 = vmatpush1.msra.mxu0 0.0
        %993 = vmatprep.subr.mxu0 0.0
        %994 = vmatpush1.msra.mxu0 0.0
        %995 = vmatprep.mubr.f32.mxu0 0.0
        %996 = vmatmul.mubr.f32.gmra.mrb[0].mxu0 %v781
        %v997 = vpop.f32.mrb[0].mxu0
        %v998 = vadd.f32 0.0, %v997
        %v999 = vpop.f32.mrb[0].mxu0
        %1000 = vdwg.mxu0
        %1001 = vmatprep.subr.mxu0 0.0
        %1002 = vmatpush1.msra.mxu0 %v927
        %1003 = vmatprep.subr.mxu0 0.0
        %1004 = vmatpush1.msra.mxu0 %v928
        %1005 = vmatprep.subr.mxu0 0.0
        %1006 = vmatpush1.msra.mxu0 %v929
        %1007 = vmatprep.subr.mxu0 0.0
        %1008 = vmatpush1.msra.mxu0 %v930
        %1009 = vmatprep.subr.mxu0 0.0
        %1010 = vmatpush1.msra.mxu0 0.0
        %1011 = vmatprep.subr.mxu0 0.0
        %1012 = vmatpush1.msra.mxu0 0.0
        %1013 = vmatprep.subr.mxu0 0.0
        %1014 = vmatpush1.msra.mxu0 0.0
        %1015 = vmatprep.subr.mxu0 0.0
        %1016 = vmatpush1.msra.mxu0 0.0
        %1017 = vmatprep.subr.mxu0 0.0
        %1018 = vmatpush1.msra.mxu0 0.0
        %1019 = vmatprep.subr.mxu0 0.0
        %1020 = vmatpush1.msra.mxu0 0.0
        %1021 = vmatprep.subr.mxu0 0.0
        %1022 = vmatpush1.msra.mxu0 0.0
        %1023 = vmatprep.subr.mxu0 0.0
        %1024 = vmatpush1.msra.mxu0 0.0
        %1025 = vmatprep.subr.mxu0 0.0
        %1026 = vmatpush1.msra.mxu0 0.0
        %1027 = vmatprep.subr.mxu0 0.0
        %1028 = vmatpush1.msra.mxu0 0.0
        %1029 = vmatprep.subr.mxu0 0.0
        %1030 = vmatpush1.msra.mxu0 0.0
        %1031 = vmatprep.subr.mxu0 0.0
        %1032 = vmatpush1.msra.mxu0 0.0
        %1033 = vmatprep.subr.mxu0 0.0
        %1034 = vmatpush1.msra.mxu0 0.0
        %1035 = vmatprep.subr.mxu0 0.0
        %1036 = vmatpush1.msra.mxu0 0.0
        %1037 = vmatprep.subr.mxu0 0.0
        %1038 = vmatpush1.msra.mxu0 0.0
        %1039 = vmatprep.subr.mxu0 0.0
        %1040 = vmatpush1.msra.mxu0 0.0
        %1041 = vmatprep.subr.mxu0 0.0
        %1042 = vmatpush1.msra.mxu0 0.0
        %1043 = vmatprep.subr.mxu0 0.0
        %1044 = vmatpush1.msra.mxu0 0.0
        %1045 = vmatprep.subr.mxu0 0.0
        %1046 = vmatpush1.msra.mxu0 0.0
        %1047 = vmatprep.subr.mxu0 0.0
        %1048 = vmatpush1.msra.mxu0 0.0
        %1049 = vmatprep.subr.mxu0 0.0
        %1050 = vmatpush1.msra.mxu0 0.0
        %1051 = vmatprep.subr.mxu0 0.0
        %1052 = vmatpush1.msra.mxu0 0.0
        %1053 = vmatprep.subr.mxu0 0.0
        %1054 = vmatpush1.msra.mxu0 0.0
        %1055 = vmatprep.subr.mxu0 0.0
        %1056 = vmatpush1.msra.mxu0 0.0
        %1057 = vmatprep.subr.mxu0 0.0
        %1058 = vmatpush1.msra.mxu0 0.0
        %1059 = vmatprep.subr.mxu0 0.0
        %1060 = vmatpush1.msra.mxu0 0.0
        %1061 = vmatprep.subr.mxu0 0.0
        %1062 = vmatpush1.msra.mxu0 0.0
        %1063 = vmatprep.subr.mxu0 0.0
        %1064 = vmatpush1.msra.mxu0 0.0
        %1065 = vmatprep.mubr.f32.mxu0 0.0
        %1066 = vmatmul.mubr.f32.gmra.mrb[0].mxu0 %v781
        %v1067 = vpop.f32.mrb[0].mxu0
        %v1068 = vadd.f32 0.0, %v1067
        %v1069 = vpop.f32.mrb[0].mxu0
        %1070 = vdwg.mxu0
        %v1071 = vld [vmem:[%s699] sm:$0xff]
        %v1072 = vld [vmem:[%s699 + $0x8] sm:$0xff]
        %v1073 = vld [vmem:[%s699 + $0x10] sm:$0xff]
        %v1074 = vld [vmem:[%s699 + $0x18] sm:$0xff]
        %v1075 = vld [vmem:[%s699 + $0x20] sm:$0xff]
        %v1076 = vld [vmem:[%s699 + $0x28] sm:$0xff]
        %v1077 = vld [vmem:[%s699 + $0x30] sm:$0xff]
        %v1078 = vld [vmem:[%s699 + $0x38] sm:$0xff]
        %1079 = vmatprep.subr.mxu0 0.0
        %1080 = vmatpush1.msra.mxu0 %v1071
        %1081 = vmatprep.subr.mxu0 0.0
        %1082 = vmatpush1.msra.mxu0 %v1072
        %1083 = vmatprep.subr.mxu0 0.0
        %1084 = vmatpush1.msra.mxu0 %v1073
        %1085 = vmatprep.subr.mxu0 0.0
        %1086 = vmatpush1.msra.mxu0 %v1074
        %1087 = vmatprep.subr.mxu0 0.0
        %1088 = vmatpush1.msra.mxu0 0.0
        %1089 = vmatprep.subr.mxu0 0.0
        %1090 = vmatpush1.msra.mxu0 0.0
        %1091 = vmatprep.subr.mxu0 0.0
        %1092 = vmatpush1.msra.mxu0 0.0
        %1093 = vmatprep.subr.mxu0 0.0
        %1094 = vmatpush1.msra.mxu0 0.0
        %1095 = vmatprep.subr.mxu0 0.0
        %1096 = vmatpush1.msra.mxu0 0.0
        %1097 = vmatprep.subr.mxu0 0.0
        %1098 = vmatpush1.msra.mxu0 0.0
        %1099 = vmatprep.subr.mxu0 0.0
        %1100 = vmatpush1.msra.mxu0 0.0
        %1101 = vmatprep.subr.mxu0 0.0
        %1102 = vmatpush1.msra.mxu0 0.0
        %1103 = vmatprep.subr.mxu0 0.0
        %1104 = vmatpush1.msra.mxu0 0.0
        %1105 = vmatprep.subr.mxu0 0.0
        %1106 = vmatpush1.msra.mxu0 0.0
        %1107 = vmatprep.subr.mxu0 0.0
        %1108 = vmatpush1.msra.mxu0 0.0
        %1109 = vmatprep.subr.mxu0 0.0
        %1110 = vmatpush1.msra.mxu0 0.0
        %1111 = vmatprep.subr.mxu0 0.0
        %1112 = vmatpush1.msra.mxu0 0.0
        %1113 = vmatprep.subr.mxu0 0.0
        %1114 = vmatpush1.msra.mxu0 0.0
        %1115 = vmatprep.subr.mxu0 0.0
        %1116 = vmatpush1.msra.mxu0 0.0
        %1117 = vmatprep.subr.mxu0 0.0
        %1118 = vmatpush1.msra.mxu0 0.0
        %1119 = vmatprep.subr.mxu0 0.0
        %1120 = vmatpush1.msra.mxu0 0.0
        %1121 = vmatprep.subr.mxu0 0.0
        %1122 = vmatpush1.msra.mxu0 0.0
        %1123 = vmatprep.subr.mxu0 0.0
        %1124 = vmatpush1.msra.mxu0 0.0
        %1125 = vmatprep.subr.mxu0 0.0
        %1126 = vmatpush1.msra.mxu0 0.0
        %1127 = vmatprep.subr.mxu0 0.0
        %1128 = vmatpush1.msra.mxu0 0.0
        %1129 = vmatprep.subr.mxu0 0.0
        %1130 = vmatpush1.msra.mxu0 0.0
        %1131 = vmatprep.subr.mxu0 0.0
        %1132 = vmatpush1.msra.mxu0 0.0
        %1133 = vmatprep.subr.mxu0 0.0
        %1134 = vmatpush1.msra.mxu0 0.0
        %1135 = vmatprep.subr.mxu0 0.0
        %1136 = vmatpush1.msra.mxu0 0.0
        %1137 = vmatprep.subr.mxu0 0.0
        %1138 = vmatpush1.msra.mxu0 0.0
        %1139 = vmatprep.subr.mxu0 0.0
        %1140 = vmatpush1.msra.mxu0 0.0
        %1141 = vmatprep.subr.mxu0 0.0
        %1142 = vmatpush1.msra.mxu0 0.0
        %1143 = vmatprep.mubr.f32.mxu0 0.0
        %1144 = vmatmul.mubr.f32.gmra.mrb[0].mxu0 %v781
        %v1145 = vpop.f32.mrb[0].mxu0
        %v1146 = vadd.f32 0.0, %v1145
        %v1147 = vpop.f32.mrb[0].mxu0
        %1148 = vdwg.mxu0
        %1149 = vmatprep.subr.mxu0 0.0
        %1150 = vmatpush1.msra.mxu0 %v1075
        %1151 = vmatprep.subr.mxu0 0.0
        %1152 = vmatpush1.msra.mxu0 %v1076
        %1153 = vmatprep.subr.mxu0 0.0
        %1154 = vmatpush1.msra.mxu0 %v1077
        %1155 = vmatprep.subr.mxu0 0.0
        %1156 = vmatpush1.msra.mxu0 %v1078
        %1157 = vmatprep.subr.mxu0 0.0
        %1158 = vmatpush1.msra.mxu0 0.0
        %1159 = vmatprep.subr.mxu0 0.0
        %1160 = vmatpush1.msra.mxu0 0.0
        %1161 = vmatprep.subr.mxu0 0.0
        %1162 = vmatpush1.msra.mxu0 0.0
        %1163 = vmatprep.subr.mxu0 0.0
        %1164 = vmatpush1.msra.mxu0 0.0
        %1165 = vmatprep.subr.mxu0 0.0
        %1166 = vmatpush1.msra.mxu0 0.0
        %1167 = vmatprep.subr.mxu0 0.0
        %1168 = vmatpush1.msra.mxu0 0.0
        %1169 = vmatprep.subr.mxu0 0.0
        %1170 = vmatpush1.msra.mxu0 0.0
        %1171 = vmatprep.subr.mxu0 0.0
        %1172 = vmatpush1.msra.mxu0 0.0
        %1173 = vmatprep.subr.mxu0 0.0
        %1174 = vmatpush1.msra.mxu0 0.0
        %1175 = vmatprep.subr.mxu0 0.0
        %1176 = vmatpush1.msra.mxu0 0.0
        %1177 = vmatprep.subr.mxu0 0.0
        %1178 = vmatpush1.msra.mxu0 0.0
        %1179 = vmatprep.subr.mxu0 0.0
        %1180 = vmatpush1.msra.mxu0 0.0
        %1181 = vmatprep.subr.mxu0 0.0
        %1182 = vmatpush1.msra.mxu0 0.0
        %1183 = vmatprep.subr.mxu0 0.0
        %1184 = vmatpush1.msra.mxu0 0.0
        %1185 = vmatprep.subr.mxu0 0.0
        %1186 = vmatpush1.msra.mxu0 0.0
        %1187 = vmatprep.subr.mxu0 0.0
        %1188 = vmatpush1.msra.mxu0 0.0
        %1189 = vmatprep.subr.mxu0 0.0
        %1190 = vmatpush1.msra.mxu0 0.0
        %1191 = vmatprep.subr.mxu0 0.0
        %1192 = vmatpush1.msra.mxu0 0.0
        %1193 = vmatprep.subr.mxu0 0.0
        %1194 = vmatpush1.msra.mxu0 0.0
        %1195 = vmatprep.subr.mxu0 0.0
        %1196 = vmatpush1.msra.mxu0 0.0
        %1197 = vmatprep.subr.mxu0 0.0
        %1198 = vmatpush1.msra.mxu0 0.0
        %1199 = vmatprep.subr.mxu0 0.0
        %1200 = vmatpush1.msra.mxu0 0.0
        %1201 = vmatprep.subr.mxu0 0.0
        %1202 = vmatpush1.msra.mxu0 0.0
        %1203 = vmatprep.subr.mxu0 0.0
        %1204 = vmatpush1.msra.mxu0 0.0
        %1205 = vmatprep.subr.mxu0 0.0
        %1206 = vmatpush1.msra.mxu0 0.0
        %1207 = vmatprep.subr.mxu0 0.0
        %1208 = vmatpush1.msra.mxu0 0.0
        %1209 = vmatprep.subr.mxu0 0.0
        %1210 = vmatpush1.msra.mxu0 0.0
        %1211 = vmatprep.subr.mxu0 0.0
        %1212 = vmatpush1.msra.mxu0 0.0
        %1213 = vmatprep.mubr.f32.mxu0 0.0
        %1214 = vmatmul.mubr.f32.gmra.mrb[0].mxu0 %v781
        %v1215 = vpop.f32.mrb[0].mxu0
        %v1216 = vadd.f32 0.0, %v1215
        %v1217 = vpop.f32.mrb[0].mxu0
        %1218 = vdwg.mxu0
        %v1219 = vld [vmem:[%s1] sm:$0xff]
        %vm1220 = vcmask 130048
        %v1222 = vsel %vm1220, %v850, 0
        %v1225 = vsel %vm1220, %v998, 0
        %1227 = vmatprep.subr.mxu0 0.0
        %1228 = vmatpush1.xpose.msra.mxu0 %v1225
        %1229 = vmatprep.subr.mxu0 0.0
        %1230 = vmatpush1.xpose.msra.mxu0 0.0
        %1231 = vmatprep.subr.mxu0 0.0
        %1232 = vmatpush1.xpose.msra.mxu0 0.0
        %1233 = vmatprep.subr.mxu0 0.0
        %1234 = vmatpush1.xpose.msra.mxu0 0.0
        %1235 = vmatprep.subr.mxu0 0.0
        %1236 = vmatpush1.xpose.msra.mxu0 0.0
        %1237 = vmatprep.subr.mxu0 0.0
        %1238 = vmatpush1.xpose.msra.mxu0 0.0
        %1239 = vmatprep.subr.mxu0 0.0
        %1240 = vmatpush1.xpose.msra.mxu0 0.0
        %1241 = vmatprep.subr.mxu0 0.0
        %1242 = vmatpush1.xpose.msra.mxu0 0.0
        %1243 = vmatprep.subr.mxu0 0.0
        %1244 = vmatpush1.xpose.msra.mxu0 0.0
        %1245 = vmatprep.subr.mxu0 0.0
        %1246 = vmatpush1.xpose.msra.mxu0 0.0
        %1247 = vmatprep.subr.mxu0 0.0
        %1248 = vmatpush1.xpose.msra.mxu0 0.0
        %1249 = vmatprep.subr.mxu0 0.0
        %1250 = vmatpush1.xpose.msra.mxu0 0.0
        %1251 = vmatprep.subr.mxu0 0.0
        %1252 = vmatpush1.xpose.msra.mxu0 0.0
        %1253 = vmatprep.subr.mxu0 0.0
        %1254 = vmatpush1.xpose.msra.mxu0 0.0
        %1255 = vmatprep.subr.mxu0 0.0
        %1256 = vmatpush1.xpose.msra.mxu0 0.0
        %1257 = vmatprep.subr.mxu0 0.0
        %1258 = vmatpush1.xpose.msra.mxu0 0.0
        %1259 = vmatprep.subr.mxu0 0.0
        %1260 = vmatpush1.xpose.msra.mxu0 0.0
        %1261 = vmatprep.subr.mxu0 0.0
        %1262 = vmatpush1.xpose.msra.mxu0 0.0
        %1263 = vmatprep.subr.mxu0 0.0
        %1264 = vmatpush1.xpose.msra.mxu0 0.0
        %1265 = vmatprep.subr.mxu0 0.0
        %1266 = vmatpush1.xpose.msra.mxu0 0.0
        %1267 = vmatprep.subr.mxu0 0.0
        %1268 = vmatpush1.xpose.msra.mxu0 0.0
        %1269 = vmatprep.subr.mxu0 0.0
        %1270 = vmatpush1.xpose.msra.mxu0 0.0
        %1271 = vmatprep.subr.mxu0 0.0
        %1272 = vmatpush1.xpose.msra.mxu0 0.0
        %1273 = vmatprep.subr.mxu0 0.0
        %1274 = vmatpush1.xpose.msra.mxu0 0.0
        %1275 = vmatprep.subr.mxu0 0.0
        %1276 = vmatpush1.xpose.msra.mxu0 0.0
        %1277 = vmatprep.subr.mxu0 0.0
        %1278 = vmatpush1.xpose.msra.mxu0 0.0
        %1279 = vmatprep.subr.mxu0 0.0
        %1280 = vmatpush1.xpose.msra.mxu0 0.0
        %1281 = vmatprep.subr.mxu0 0.0
        %1282 = vmatpush1.xpose.msra.mxu0 0.0
        %1283 = vmatprep.subr.mxu0 0.0
        %1284 = vmatpush1.xpose.msra.mxu0 0.0
        %1285 = vmatprep.subr.mxu0 0.0
        %1286 = vmatpush1.xpose.msra.mxu0 0.0
        %1287 = vmatprep.subr.mxu0 0.0
        %1288 = vmatpush1.xpose.msra.mxu0 0.0
        %1289 = vmatprep.subr.mxu0 0.0
        %1290 = vmatpush1.xpose.msra.mxu0 0.0
        %1291 = vmatprep.mubr.f32.mxu0 0.0
        %1292 = vmatmul.mubr.f32.gmra.mrb[0].mxu0 %v1222
        %v1293 = vpop.f32.mrb[0].mxu0
        %v1294 = vadd.f32 %v1219, %v1293
        %v1295 = vpop.f32.mrb[0].mxu0
        %1296 = vdwg.mxu0
        %v1298 = vsel %vm1220, %v920, 0
        %v1301 = vsel %vm1220, %v1068, 0
        %1303 = vmatprep.subr.mxu0 0.0
        %1304 = vmatpush1.xpose.msra.mxu0 %v1301
        %1305 = vmatprep.subr.mxu0 0.0
        %1306 = vmatpush1.xpose.msra.mxu0 0.0
        %1307 = vmatprep.subr.mxu0 0.0
        %1308 = vmatpush1.xpose.msra.mxu0 0.0
        %1309 = vmatprep.subr.mxu0 0.0
        %1310 = vmatpush1.xpose.msra.mxu0 0.0
        %1311 = vmatprep.subr.mxu0 0.0
        %1312 = vmatpush1.xpose.msra.mxu0 0.0
        %1313 = vmatprep.subr.mxu0 0.0
        %1314 = vmatpush1.xpose.msra.mxu0 0.0
        %1315 = vmatprep.subr.mxu0 0.0
        %1316 = vmatpush1.xpose.msra.mxu0 0.0
        %1317 = vmatprep.subr.mxu0 0.0
        %1318 = vmatpush1.xpose.msra.mxu0 0.0
        %1319 = vmatprep.subr.mxu0 0.0
        %1320 = vmatpush1.xpose.msra.mxu0 0.0
        %1321 = vmatprep.subr.mxu0 0.0
        %1322 = vmatpush1.xpose.msra.mxu0 0.0
        %1323 = vmatprep.subr.mxu0 0.0
        %1324 = vmatpush1.xpose.msra.mxu0 0.0
        %1325 = vmatprep.subr.mxu0 0.0
        %1326 = vmatpush1.xpose.msra.mxu0 0.0
        %1327 = vmatprep.subr.mxu0 0.0
        %1328 = vmatpush1.xpose.msra.mxu0 0.0
        %1329 = vmatprep.subr.mxu0 0.0
        %1330 = vmatpush1.xpose.msra.mxu0 0.0
        %1331 = vmatprep.subr.mxu0 0.0
        %1332 = vmatpush1.xpose.msra.mxu0 0.0
        %1333 = vmatprep.subr.mxu0 0.0
        %1334 = vmatpush1.xpose.msra.mxu0 0.0
        %1335 = vmatprep.subr.mxu0 0.0
        %1336 = vmatpush1.xpose.msra.mxu0 0.0
        %1337 = vmatprep.subr.mxu0 0.0
        %1338 = vmatpush1.xpose.msra.mxu0 0.0
        %1339 = vmatprep.subr.mxu0 0.0
        %1340 = vmatpush1.xpose.msra.mxu0 0.0
        %1341 = vmatprep.subr.mxu0 0.0
        %1342 = vmatpush1.xpose.msra.mxu0 0.0
        %1343 = vmatprep.subr.mxu0 0.0
        %1344 = vmatpush1.xpose.msra.mxu0 0.0
        %1345 = vmatprep.subr.mxu0 0.0
        %1346 = vmatpush1.xpose.msra.mxu0 0.0
        %1347 = vmatprep.subr.mxu0 0.0
        %1348 = vmatpush1.xpose.msra.mxu0 0.0
        %1349 = vmatprep.subr.mxu0 0.0
        %1350 = vmatpush1.xpose.msra.mxu0 0.0
        %1351 = vmatprep.subr.mxu0 0.0
        %1352 = vmatpush1.xpose.msra.mxu0 0.0
        %1353 = vmatprep.subr.mxu0 0.0
        %1354 = vmatpush1.xpose.msra.mxu0 0.0
        %1355 = vmatprep.subr.mxu0 0.0
        %1356 = vmatpush1.xpose.msra.mxu0 0.0
        %1357 = vmatprep.subr.mxu0 0.0
        %1358 = vmatpush1.xpose.msra.mxu0 0.0
        %1359 = vmatprep.subr.mxu0 0.0
        %1360 = vmatpush1.xpose.msra.mxu0 0.0
        %1361 = vmatprep.subr.mxu0 0.0
        %1362 = vmatpush1.xpose.msra.mxu0 0.0
        %1363 = vmatprep.subr.mxu0 0.0
        %1364 = vmatpush1.xpose.msra.mxu0 0.0
        %1365 = vmatprep.subr.mxu0 0.0
        %1366 = vmatpush1.xpose.msra.mxu0 0.0
        %1367 = vmatprep.mubr.f32.mxu0 0.0
        %1368 = vmatmul.mubr.f32.gmra.mrb[0].mxu0 %v1298
        %v1369 = vpop.f32.mrb[0].mxu0
        %v1370 = vadd.f32 %v1219, %v1369
        %v1371 = vpop.f32.mrb[0].mxu0
        %1372 = vdwg.mxu0
        %vm1373 = vcmask 64512
        %v1374 = vsel %vm1373, %v1294, -inf
        %1375 = vmax.xlane.f32.xlu0 %v1374
        %v1376 = vpop.xlane.xlu0 %1375
        %v1377 = vsel %vm1373, %v1370, -inf
        %1378 = vmax.xlane.f32.xlu0 %v1377
        %v1379 = vpop.xlane.xlu0 %1378
        %v1380 = vsub.f32 %v1294, %v1376
        %v1381 = vsub.f32 %v1370, %v1379
        %v1382 = vmul.f32 %v1380, 1.442695
        %v1383 = vpow.pop %v1382
        %v1384 = vmul.f32 %v1381, 1.442695
        %v1385 = vpow.pop %v1384
        %v1386 = vsel %vm1373, %v1383, 0.0
        %1387 = vadd.xlane.f32.xlu0 %v1386
        %v1388 = vpop.xlane.xlu0 %1387
        %v1389 = vsel %vm1373, %v1385, 0.0
        %1390 = vadd.xlane.f32.xlu0 %v1389
        %v1391 = vpop.xlane.xlu0 %1390
        %v1392 = vrcp.pop %v1388
        %v1393 = vrcp.pop %v1391
        %v1394 = vmul.f32 %v1388, %v1392
        %v1395 = vmul.f32 %v1391, %v1393
        %v1396 = vsub.f32 2.0, %v1394
        %v1397 = vsub.f32 2.0, %v1395
        %v1398 = vmul.f32 %v1392, %v1396
        %v1399 = vmul.f32 %v1393, %v1397
        %v1400 = vmul.f32 %v1383, %v1398
        %v1401 = vmul.f32 %v1385, %v1399
        %v1403 = vsel %vm1373, %v1400, 0
        %1405 = vmatprep.subr.mxu0 0.0
        %1406 = vmatpush1.msra.mxu0 %v1146
        %1407 = vmatprep.subr.mxu0 0.0
        %1408 = vmatpush1.msra.mxu0 0.0
        %1409 = vmatprep.subr.mxu0 0.0
        %1410 = vmatpush1.msra.mxu0 0.0
        %1411 = vmatprep.subr.mxu0 0.0
        %1412 = vmatpush1.msra.mxu0 0.0
        %1413 = vmatprep.subr.mxu0 0.0
        %1414 = vmatpush1.msra.mxu0 0.0
        %1415 = vmatprep.subr.mxu0 0.0
        %1416 = vmatpush1.msra.mxu0 0.0
        %1417 = vmatprep.subr.mxu0 0.0
        %1418 = vmatpush1.msra.mxu0 0.0
        %1419 = vmatprep.subr.mxu0 0.0
        %1420 = vmatpush1.msra.mxu0 0.0
        %1421 = vmatprep.subr.mxu0 0.0
        %1422 = vmatpush1.msra.mxu0 0.0
        %1423 = vmatprep.subr.mxu0 0.0
        %1424 = vmatpush1.msra.mxu0 0.0
        %1425 = vmatprep.subr.mxu0 0.0
        %1426 = vmatpush1.msra.mxu0 0.0
        %1427 = vmatprep.subr.mxu0 0.0
        %1428 = vmatpush1.msra.mxu0 0.0
        %1429 = vmatprep.subr.mxu0 0.0
        %1430 = vmatpush1.msra.mxu0 0.0
        %1431 = vmatprep.subr.mxu0 0.0
        %1432 = vmatpush1.msra.mxu0 0.0
        %1433 = vmatprep.subr.mxu0 0.0
        %1434 = vmatpush1.msra.mxu0 0.0
        %1435 = vmatprep.subr.mxu0 0.0
        %1436 = vmatpush1.msra.mxu0 0.0
        %1437 = vmatprep.subr.mxu0 0.0
        %1438 = vmatpush1.msra.mxu0 0.0
        %1439 = vmatprep.subr.mxu0 0.0
        %1440 = vmatpush1.msra.mxu0 0.0
        %1441 = vmatprep.subr.mxu0 0.0
        %1442 = vmatpush1.msra.mxu0 0.0
        %1443 = vmatprep.subr.mxu0 0.0
        %1444 = vmatpush1.msra.mxu0 0.0
        %1445 = vmatprep.subr.mxu0 0.0
        %1446 = vmatpush1.msra.mxu0 0.0
        %1447 = vmatprep.subr.mxu0 0.0
        %1448 = vmatpush1.msra.mxu0 0.0
        %1449 = vmatprep.subr.mxu0 0.0
        %1450 = vmatpush1.msra.mxu0 0.0
        %1451 = vmatprep.subr.mxu0 0.0
        %1452 = vmatpush1.msra.mxu0 0.0
        %1453 = vmatprep.subr.mxu0 0.0
        %1454 = vmatpush1.msra.mxu0 0.0
        %1455 = vmatprep.subr.mxu0 0.0
        %1456 = vmatpush1.msra.mxu0 0.0
        %1457 = vmatprep.subr.mxu0 0.0
        %1458 = vmatpush1.msra.mxu0 0.0
        %1459 = vmatprep.subr.mxu0 0.0
        %1460 = vmatpush1.msra.mxu0 0.0
        %1461 = vmatprep.subr.mxu0 0.0
        %1462 = vmatpush1.msra.mxu0 0.0
        %1463 = vmatprep.subr.mxu0 0.0
        %1464 = vmatpush1.msra.mxu0 0.0
        %1465 = vmatprep.subr.mxu0 0.0
        %1466 = vmatpush1.msra.mxu0 0.0
        %1467 = vmatprep.subr.mxu0 0.0
        %1468 = vmatpush1.msra.mxu0 0.0
        %1469 = vmatprep.mubr.f32.mxu0 0.0
        %1470 = vmatmul.mubr.f32.gmra.mrb[0].mxu0 %v1403
        %v1471 = vpop.f32.mrb[0].mxu0
        %v1472 = vadd.f32 0.0, %v1471
        %v1473 = vpop.f32.mrb[0].mxu0
        %1474 = vdwg.mxu0
        %v1476 = vsel %vm1373, %v1401, 0
        %1478 = vmatprep.subr.mxu0 0.0
        %1479 = vmatpush1.msra.mxu0 %v1216
        %1480 = vmatprep.subr.mxu0 0.0
        %1481 = vmatpush1.msra.mxu0 0.0
        %1482 = vmatprep.subr.mxu0 0.0
        %1483 = vmatpush1.msra.mxu0 0.0
        %1484 = vmatprep.subr.mxu0 0.0
        %1485 = vmatpush1.msra.mxu0 0.0
        %1486 = vmatprep.subr.mxu0 0.0
        %1487 = vmatpush1.msra.mxu0 0.0
        %1488 = vmatprep.subr.mxu0 0.0
        %1489 = vmatpush1.msra.mxu0 0.0
        %1490 = vmatprep.subr.mxu0 0.0
        %1491 = vmatpush1.msra.mxu0 0.0
        %1492 = vmatprep.subr.mxu0 0.0
        %1493 = vmatpush1.msra.mxu0 0.0
        %1494 = vmatprep.subr.mxu0 0.0
        %1495 = vmatpush1.msra.mxu0 0.0
        %1496 = vmatprep.subr.mxu0 0.0
        %1497 = vmatpush1.msra.mxu0 0.0
        %1498 = vmatprep.subr.mxu0 0.0
        %1499 = vmatpush1.msra.mxu0 0.0
        %1500 = vmatprep.subr.mxu0 0.0
        %1501 = vmatpush1.msra.mxu0 0.0
        %1502 = vmatprep.subr.mxu0 0.0
        %1503 = vmatpush1.msra.mxu0 0.0
        %1504 = vmatprep.subr.mxu0 0.0
        %1505 = vmatpush1.msra.mxu0 0.0
        %1506 = vmatprep.subr.mxu0 0.0
        %1507 = vmatpush1.msra.mxu0 0.0
        %1508 = vmatprep.subr.mxu0 0.0
        %1509 = vmatpush1.msra.mxu0 0.0
        %1510 = vmatprep.subr.mxu0 0.0
        %1511 = vmatpush1.msra.mxu0 0.0
        %1512 = vmatprep.subr.mxu0 0.0
        %1513 = vmatpush1.msra.mxu0 0.0
        %1514 = vmatprep.subr.mxu0 0.0
        %1515 = vmatpush1.msra.mxu0 0.0
        %1516 = vmatprep.subr.mxu0 0.0
        %1517 = vmatpush1.msra.mxu0 0.0
        %1518 = vmatprep.subr.mxu0 0.0
        %1519 = vmatpush1.msra.mxu0 0.0
        %1520 = vmatprep.subr.mxu0 0.0
        %1521 = vmatpush1.msra.mxu0 0.0
        %1522 = vmatprep.subr.mxu0 0.0
        %1523 = vmatpush1.msra.mxu0 0.0
        %1524 = vmatprep.subr.mxu0 0.0
        %1525 = vmatpush1.msra.mxu0 0.0
        %1526 = vmatprep.subr.mxu0 0.0
        %1527 = vmatpush1.msra.mxu0 0.0
        %1528 = vmatprep.subr.mxu0 0.0
        %1529 = vmatpush1.msra.mxu0 0.0
        %1530 = vmatprep.subr.mxu0 0.0
        %1531 = vmatpush1.msra.mxu0 0.0
        %1532 = vmatprep.subr.mxu0 0.0
        %1533 = vmatpush1.msra.mxu0 0.0
        %1534 = vmatprep.subr.mxu0 0.0
        %1535 = vmatpush1.msra.mxu0 0.0
        %1536 = vmatprep.subr.mxu0 0.0
        %1537 = vmatpush1.msra.mxu0 0.0
        %1538 = vmatprep.subr.mxu0 0.0
        %1539 = vmatpush1.msra.mxu0 0.0
        %1540 = vmatprep.subr.mxu0 0.0
        %1541 = vmatpush1.msra.mxu0 0.0
        %1542 = vmatprep.mubr.f32.mxu0 0.0
        %1543 = vmatmul.mubr.f32.gmra.mrb[0].mxu0 %v1476
        %v1544 = vpop.f32.mrb[0].mxu0
        %v1545 = vadd.f32 0.0, %v1544
        %v1546 = vpop.f32.mrb[0].mxu0
        %1547 = vdwg.mxu0
        %v1548 = vld [vmem:[%s704] sm:$0xff]
        %v1549 = vld [vmem:[%s704 + $0x8] sm:$0xff]
        %v1550 = vld [vmem:[%s704 + $0x10] sm:$0xff]
        %v1551 = vld [vmem:[%s704 + $0x18] sm:$0xff]
        %v1553 = vsel %vm1220, %v1472, 0
        %1555 = vmatprep.subr.mxu0 0.0
        %1556 = vmatpush1.msra.mxu0 %v1548
        %1557 = vmatprep.subr.mxu0 0.0
        %1558 = vmatpush1.msra.mxu0 %v1549
        %1559 = vmatprep.subr.mxu0 0.0
        %1560 = vmatpush1.msra.mxu0 0.0
        %1561 = vmatprep.subr.mxu0 0.0
        %1562 = vmatpush1.msra.mxu0 0.0
        %1563 = vmatprep.subr.mxu0 0.0
        %1564 = vmatpush1.msra.mxu0 0.0
        %1565 = vmatprep.subr.mxu0 0.0
        %1566 = vmatpush1.msra.mxu0 0.0
        %1567 = vmatprep.subr.mxu0 0.0
        %1568 = vmatpush1.msra.mxu0 0.0
        %1569 = vmatprep.subr.mxu0 0.0
        %1570 = vmatpush1.msra.mxu0 0.0
        %1571 = vmatprep.subr.mxu0 0.0
        %1572 = vmatpush1.msra.mxu0 0.0
        %1573 = vmatprep.subr.mxu0 0.0
        %1574 = vmatpush1.msra.mxu0 0.0
        %1575 = vmatprep.subr.mxu0 0.0
        %1576 = vmatpush1.msra.mxu0 0.0
        %1577 = vmatprep.subr.mxu0 0.0
        %1578 = vmatpush1.msra.mxu0 0.0
        %1579 = vmatprep.subr.mxu0 0.0
        %1580 = vmatpush1.msra.mxu0 0.0
        %1581 = vmatprep.subr.mxu0 0.0
        %1582 = vmatpush1.msra.mxu0 0.0
        %1583 = vmatprep.subr.mxu0 0.0
        %1584 = vmatpush1.msra.mxu0 0.0
        %1585 = vmatprep.subr.mxu0 0.0
        %1586 = vmatpush1.msra.mxu0 0.0
        %1587 = vmatprep.subr.mxu0 0.0
        %1588 = vmatpush1.msra.mxu0 0.0
        %1589 = vmatprep.subr.mxu0 0.0
        %1590 = vmatpush1.msra.mxu0 0.0
        %1591 = vmatprep.subr.mxu0 0.0
        %1592 = vmatpush1.msra.mxu0 0.0
        %1593 = vmatprep.subr.mxu0 0.0
        %1594 = vmatpush1.msra.mxu0 0.0
        %1595 = vmatprep.subr.mxu0 0.0
        %1596 = vmatpush1.msra.mxu0 0.0
        %1597 = vmatprep.subr.mxu0 0.0
        %1598 = vmatpush1.msra.mxu0 0.0
        %1599 = vmatprep.subr.mxu0 0.0
        %1600 = vmatpush1.msra.mxu0 0.0
        %1601 = vmatprep.subr.mxu0 0.0
        %1602 = vmatpush1.msra.mxu0 0.0
        %1603 = vmatprep.subr.mxu0 0.0
        %1604 = vmatpush1.msra.mxu0 0.0
        %1605 = vmatprep.subr.mxu0 0.0
        %1606 = vmatpush1.msra.mxu0 0.0
        %1607 = vmatprep.subr.mxu0 0.0
        %1608 = vmatpush1.msra.mxu0 0.0
        %1609 = vmatprep.subr.mxu0 0.0
        %1610 = vmatpush1.msra.mxu0 0.0
        %1611 = vmatprep.subr.mxu0 0.0
        %1612 = vmatpush1.msra.mxu0 0.0
        %1613 = vmatprep.subr.mxu0 0.0
        %1614 = vmatpush1.msra.mxu0 0.0
        %1615 = vmatprep.subr.mxu0 0.0
        %1616 = vmatpush1.msra.mxu0 0.0
        %1617 = vmatprep.subr.mxu0 0.0
        %1618 = vmatpush1.msra.mxu0 0.0
        %1619 = vmatprep.mubr.f32.mxu0 0.0
        %1620 = vmatmul.mubr.f32.gmra.mrb[0].mxu0 %v1553
        %v1621 = vpop.f32.mrb[0].mxu0
        %v1622 = vadd.f32 0.0, %v1621
        %v1623 = vpop.f32.mrb[0].mxu0
        %1624 = vdwg.mxu0
        %v1626 = vsel %vm1220, %v1545, 0
        %1628 = vmatprep.subr.mxu0 0.0
        %1629 = vmatpush1.msra.mxu0 %v1550
        %1630 = vmatprep.subr.mxu0 0.0
        %1631 = vmatpush1.msra.mxu0 %v1551
        %1632 = vmatprep.subr.mxu0 0.0
        %1633 = vmatpush1.msra.mxu0 0.0
        %1634 = vmatprep.subr.mxu0 0.0
        %1635 = vmatpush1.msra.mxu0 0.0
        %1636 = vmatprep.subr.mxu0 0.0
        %1637 = vmatpush1.msra.mxu0 0.0
        %1638 = vmatprep.subr.mxu0 0.0
        %1639 = vmatpush1.msra.mxu0 0.0
        %1640 = vmatprep.subr.mxu0 0.0
        %1641 = vmatpush1.msra.mxu0 0.0
        %1642 = vmatprep.subr.mxu0 0.0
        %1643 = vmatpush1.msra.mxu0 0.0
        %1644 = vmatprep.subr.mxu0 0.0
        %1645 = vmatpush1.msra.mxu0 0.0
        %1646 = vmatprep.subr.mxu0 0.0
        %1647 = vmatpush1.msra.mxu0 0.0
        %1648 = vmatprep.subr.mxu0 0.0
        %1649 = vmatpush1.msra.mxu0 0.0
        %1650 = vmatprep.subr.mxu0 0.0
        %1651 = vmatpush1.msra.mxu0 0.0
        %1652 = vmatprep.subr.mxu0 0.0
        %1653 = vmatpush1.msra.mxu0 0.0
        %1654 = vmatprep.subr.mxu0 0.0
        %1655 = vmatpush1.msra.mxu0 0.0
        %1656 = vmatprep.subr.mxu0 0.0
        %1657 = vmatpush1.msra.mxu0 0.0
        %1658 = vmatprep.subr.mxu0 0.0
        %1659 = vmatpush1.msra.mxu0 0.0
        %1660 = vmatprep.subr.mxu0 0.0
        %1661 = vmatpush1.msra.mxu0 0.0
        %1662 = vmatprep.subr.mxu0 0.0
        %1663 = vmatpush1.msra.mxu0 0.0
        %1664 = vmatprep.subr.mxu0 0.0
        %1665 = vmatpush1.msra.mxu0 0.0
        %1666 = vmatprep.subr.mxu0 0.0
        %1667 = vmatpush1.msra.mxu0 0.0
        %1668 = vmatprep.subr.mxu0 0.0
        %1669 = vmatpush1.msra.mxu0 0.0
        %1670 = vmatprep.subr.mxu0 0.0
        %1671 = vmatpush1.msra.mxu0 0.0
        %1672 = vmatprep.subr.mxu0 0.0
        %1673 = vmatpush1.msra.mxu0 0.0
        %1674 = vmatprep.subr.mxu0 0.0
        %1675 = vmatpush1.msra.mxu0 0.0
        %1676 = vmatprep.subr.mxu0 0.0
        %1677 = vmatpush1.msra.mxu0 0.0
        %1678 = vmatprep.subr.mxu0 0.0
        %1679 = vmatpush1.msra.mxu0 0.0
        %1680 = vmatprep.subr.mxu0 0.0
        %1681 = vmatpush1.msra.mxu0 0.0
        %1682 = vmatprep.subr.mxu0 0.0
        %1683 = vmatpush1.msra.mxu0 0.0
        %1684 = vmatprep.subr.mxu0 0.0
        %1685 = vmatpush1.msra.mxu0 0.0
        %1686 = vmatprep.subr.mxu0 0.0
        %1687 = vmatpush1.msra.mxu0 0.0
        %1688 = vmatprep.subr.mxu0 0.0
        %1689 = vmatpush1.msra.mxu0 0.0
        %1690 = vmatprep.subr.mxu0 0.0
        %1691 = vmatpush1.msra.mxu0 0.0
        %1692 = vmatprep.mubr.f32.mxu0 0.0
        %1693 = vmatmul.mubr.f32.gmra.mrb[0].mxu0 %v1626
        %v1694 = vpop.f32.mrb[0].mxu0
        %v1695 = vadd.f32 0.0, %v1694
        %v1696 = vpop.f32.mrb[0].mxu0
        %1697 = vdwg.mxu0
        %v1698 = vsel %vm743, %v1622, 0.0
        %v1699 = vsel %vm743, %v1695, 0.0
        %v1700 = vadd.f32 %v1698, %v1699
        %v1701 = vadd.f32 %v740, %v1700
        %v1702 = vld [vmem:[%s713] sm:$0x1]
        %v1703 = vld [vmem:[%s716] sm:$0x1]
        %v1704 = vsel %vm743, %v1701, 0.0
        %1705 = vadd.xlane.f32.xlu0 %v1704
        %v1706 = vpop.xlane.xlu0 %1705
        %v1707 = vmul.f32 %v1706, %v747
        %v1708 = vsub.f32 %v1701, %v1707
        %v1709 = vmul.f32 %v1708, %v1708
        %v1710 = vsel %vm743, %v1709, 0.0
        %1711 = vadd.xlane.f32.xlu0 %v1710
        %v1712 = vpop.xlane.xlu0 %1711
        %v1713 = vmul.f32 %v1712, %v747
        %v1714 = vadd.f32 %v1713, 1e-05
        %v1715 = vrsqrt.pop %v1714
        %v1716 = vmul.f32 %v1708, %v1715
        %v1718 = vlaneseq
        %v1719 = vshrl.u32 %v1718, 7
        %v1720 = vsub.s32 0, %v1719
        %v1721 = vrot.slane %v1702, %v1720
        %v1723 = vmul.f32 %v1716, %v1721
        %v1725 = vlaneseq
        %v1726 = vshrl.u32 %v1725, 7
        %v1727 = vsub.s32 0, %v1726
        %v1728 = vrot.slane %v1703, %v1727
        %v1730 = vadd.f32 %v1723, %v1728
        %v1731 = vld [vmem:[%s721] sm:$0xff]
        %v1732 = vld [vmem:[%s721 + $0x8] sm:$0xff]
        %v1733 = vld [vmem:[%s721 + $0x10] sm:$0xff]
        %v1734 = vld [vmem:[%s721 + $0x18] sm:$0xff]
        %v1735 = vld [vmem:[%s724] sm:$0x1]
        %v1737 = vlaneseq
        %v1738 = vshrl.u32 %v1737, 7
        %v1739 = vsub.s32 0, %v1738
        %v1740 = vrot.slane %v1735, %v1739
        %v1743 = vsel %vm743, %v1730, 0
        %1745 = vmatprep.subr.mxu0 0.0
        %1746 = vmatpush1.msra.mxu0 %v1731
        %1747 = vmatprep.subr.mxu0 0.0
        %1748 = vmatpush1.msra.mxu0 %v1732
        %1749 = vmatprep.subr.mxu0 0.0
        %1750 = vmatpush1.msra.mxu0 %v1733
        %1751 = vmatprep.subr.mxu0 0.0
        %1752 = vmatpush1.msra.mxu0 %v1734
        %1753 = vmatprep.subr.mxu0 0.0
        %1754 = vmatpush1.msra.mxu0 0.0
        %1755 = vmatprep.subr.mxu0 0.0
        %1756 = vmatpush1.msra.mxu0 0.0
        %1757 = vmatprep.subr.mxu0 0.0
        %1758 = vmatpush1.msra.mxu0 0.0
        %1759 = vmatprep.subr.mxu0 0.0
        %1760 = vmatpush1.msra.mxu0 0.0
        %1761 = vmatprep.subr.mxu0 0.0
        %1762 = vmatpush1.msra.mxu0 0.0
        %1763 = vmatprep.subr.mxu0 0.0
        %1764 = vmatpush1.msra.mxu0 0.0
        %1765 = vmatprep.subr.mxu0 0.0
        %1766 = vmatpush1.msra.mxu0 0.0
        %1767 = vmatprep.subr.mxu0 0.0
        %1768 = vmatpush1.msra.mxu0 0.0
        %1769 = vmatprep.subr.mxu0 0.0
        %1770 = vmatpush1.msra.mxu0 0.0
        %1771 = vmatprep.subr.mxu0 0.0
        %1772 = vmatpush1.msra.mxu0 0.0
        %1773 = vmatprep.subr.mxu0 0.0
        %1774 = vmatpush1.msra.mxu0 0.0
        %1775 = vmatprep.subr.mxu0 0.0
        %1776 = vmatpush1.msra.mxu0 0.0
        %1777 = vmatprep.subr.mxu0 0.0
        %1778 = vmatpush1.msra.mxu0 0.0
        %1779 = vmatprep.subr.mxu0 0.0
        %1780 = vmatpush1.msra.mxu0 0.0
        %1781 = vmatprep.subr.mxu0 0.0
        %1782 = vmatpush1.msra.mxu0 0.0
        %1783 = vmatprep.subr.mxu0 0.0
        %1784 = vmatpush1.msra.mxu0 0.0
        %1785 = vmatprep.subr.mxu0 0.0
        %1786 = vmatpush1.msra.mxu0 0.0
        %1787 = vmatprep.subr.mxu0 0.0
        %1788 = vmatpush1.msra.mxu0 0.0
        %1789 = vmatprep.subr.mxu0 0.0
        %1790 = vmatpush1.msra.mxu0 0.0
        %1791 = vmatprep.subr.mxu0 0.0
        %1792 = vmatpush1.msra.mxu0 0.0
        %1793 = vmatprep.subr.mxu0 0.0
        %1794 = vmatpush1.msra.mxu0 0.0
        %1795 = vmatprep.subr.mxu0 0.0
        %1796 = vmatpush1.msra.mxu0 0.0
        %1797 = vmatprep.subr.mxu0 0.0
        %1798 = vmatpush1.msra.mxu0 0.0
        %1799 = vmatprep.subr.mxu0 0.0
        %1800 = vmatpush1.msra.mxu0 0.0
        %1801 = vmatprep.subr.mxu0 0.0
        %1802 = vmatpush1.msra.mxu0 0.0
        %1803 = vmatprep.subr.mxu0 0.0
        %1804 = vmatpush1.msra.mxu0 0.0
        %1805 = vmatprep.subr.mxu0 0.0
        %1806 = vmatpush1.msra.mxu0 0.0
        %1807 = vmatprep.subr.mxu0 0.0
        %1808 = vmatpush1.msra.mxu0 0.0
        %1809 = vmatprep.mubr.f32.mxu0 0.0
        %1810 = vmatmul.mubr.f32.gmra.mrb[0].mxu0 %v1743
        %v1811 = vpop.f32.mrb[0].mxu0
        %v1812 = vadd.f32 %v1740, %v1811
        %v1813 = vpop.f32.mrb[0].mxu0
        %1814 = vdwg.mxu0
        %v1815 = vmax.f32 %v1812, 0.0
        %v1816 = vld [vmem:[%s729] sm:$0xff]
        %v1817 = vld [vmem:[%s729 + $0x8] sm:$0xff]
        %v1818 = vld [vmem:[%s729 + $0x10] sm:$0xff]
        %v1819 = vld [vmem:[%s729 + $0x18] sm:$0xff]
        %v1820 = vld [vmem:[%s729 + $0x20] sm:$0xff]
        %v1821 = vld [vmem:[%s729 + $0x28] sm:$0xff]
        %v1822 = vld [vmem:[%s729 + $0x30] sm:$0xff]
        %v1823 = vld [vmem:[%s729 + $0x38] sm:$0xff]
        %vm1824 = vcmask 523264
        %v1826 = vsel %vm1824, %v1815, 0
        %1828 = vmatprep.subr.mxu0 0.0
        %1829 = vmatpush1.msra.mxu0 %v1816
        %1830 = vmatprep.subr.mxu0 0.0
        %1831 = vmatpush1.msra.mxu0 %v1817
        %1832 = vmatprep.subr.mxu0 0.0
        %1833 = vmatpush1.msra.mxu0 %v1818
        %1834 = vmatprep.subr.mxu0 0.0
        %1835 = vmatpush1.msra.mxu0 %v1819
        %1836 = vmatprep.subr.mxu0 0.0
        %1837 = vmatpush1.msra.mxu0 %v1820
        %1838 = vmatprep.subr.mxu0 0.0
        %1839 = vmatpush1.msra.mxu0 %v1821
        %1840 = vmatprep.subr.mxu0 0.0
        %1841 = vmatpush1.msra.mxu0 %v1822
        %1842 = vmatprep.subr.mxu0 0.0
        %1843 = vmatpush1.msra.mxu0 %v1823
        %1844 = vmatprep.subr.mxu0 0.0
        %1845 = vmatpush1.msra.mxu0 0.0
        %1846 = vmatprep.subr.mxu0 0.0
        %1847 = vmatpush1.msra.mxu0 0.0
        %1848 = vmatprep.subr.mxu0 0.0
        %1849 = vmatpush1.msra.mxu0 0.0
        %1850 = vmatprep.subr.mxu0 0.0
        %1851 = vmatpush1.msra.mxu0 0.0
        %1852 = vmatprep.subr.mxu0 0.0
        %1853 = vmatpush1.msra.mxu0 0.0
        %1854 = vmatprep.subr.mxu0 0.0
        %1855 = vmatpush1.msra.mxu0 0.0
        %1856 = vmatprep.subr.mxu0 0.0
        %1857 = vmatpush1.msra.mxu0 0.0
        %1858 = vmatprep.subr.mxu0 0.0
        %1859 = vmatpush1.msra.mxu0 0.0
        %1860 = vmatprep.subr.mxu0 0.0
        %1861 = vmatpush1.msra.mxu0 0.0
        %1862 = vmatprep.subr.mxu0 0.0
        %1863 = vmatpush1.msra.mxu0 0.0
        %1864 = vmatprep.subr.mxu0 0.0
        %1865 = vmatpush1.msra.mxu0 0.0
        %1866 = vmatprep.subr.mxu0 0.0
        %1867 = vmatpush1.msra.mxu0 0.0
        %1868 = vmatprep.subr.mxu0 0.0
        %1869 = vmatpush1.msra.mxu0 0.0
        %1870 = vmatprep.subr.mxu0 0.0
        %1871 = vmatpush1.msra.mxu0 0.0
        %1872 = vmatprep.subr.mxu0 0.0
        %1873 = vmatpush1.msra.mxu0 0.0
        %1874 = vmatprep.subr.mxu0 0.0
        %1875 = vmatpush1.msra.mxu0 0.0
        %1876 = vmatprep.subr.mxu0 0.0
        %1877 = vmatpush1.msra.mxu0 0.0
        %1878 = vmatprep.subr.mxu0 0.0
        %1879 = vmatpush1.msra.mxu0 0.0
        %1880 = vmatprep.subr.mxu0 0.0
        %1881 = vmatpush1.msra.mxu0 0.0
        %1882 = vmatprep.subr.mxu0 0.0
        %1883 = vmatpush1.msra.mxu0 0.0
        %1884 = vmatprep.subr.mxu0 0.0
        %1885 = vmatpush1.msra.mxu0 0.0
        %1886 = vmatprep.subr.mxu0 0.0
        %1887 = vmatpush1.msra.mxu0 0.0
        %1888 = vmatprep.subr.mxu0 0.0
        %1889 = vmatpush1.msra.mxu0 0.0
        %1890 = vmatprep.subr.mxu0 0.0
        %1891 = vmatpush1.msra.mxu0 0.0
        %1892 = vmatprep.mubr.f32.mxu0 0.0
        %1893 = vmatmul.mubr.f32.gmra.mrb[0].mxu0 %v1826
        %v1894 = vpop.f32.mrb[0].mxu0
        %v1895 = vadd.f32 0.0, %v1894
        %v1896 = vpop.f32.mrb[0].mxu0
        %1897 = vdwg.mxu0
        %v1898 = vadd.f32 %v1701, %v1895
        %v1899 = vld [vmem:[%s732] sm:$0x1]
        %v1901 = vlaneseq
        %v1902 = vshrl.u32 %v1901, 7
        %v1903 = vsub.s32 0, %v1902
        %v1904 = vrot.slane %v1899, %v1903
        %v1906 = vadd.f32 %v1898, %v1904
        %1907 = vst.msk [vmem:[#allocation2] sm:$0xff] %vm743, %v1906
        %p1908 = scmp.eq.s32.totalorder %s35, 1
        // Predicated region
        $region89: #{tpu_custom_call.1} parent=83 // pred_check
          %p1909 = pneg %p1908
        $region90: #{tpu_custom_call.1} parent=83 // pred_check_branch
          %1911 = sbr.rel (%p1909) target = $region92
        $region91: #{tpu_custom_call.1} parent=83 // pred_region
          %v1912 = vld [vmem:[%s14] sm:$0xff]
          %v1913 = vld [vmem:[%s14 + $0x8] sm:$0xff]
          %v1914 = vld [vmem:[%s14 + $0x10] sm:$0xff]
          %v1915 = vld [vmem:[%s14 + $0x18] sm:$0xff]
          %v1916 = vld [vmem:[%s15] sm:$0x1]
          %v1918 = vlaneseq
          %v1919 = vshrl.u32 %v1918, 7
          %v1920 = vsub.s32 0, %v1919
          %v1921 = vrot.slane %v1916, %v1920
          %v1924 = vsel %vm743, %v1906, 0
          %1926 = vmatprep.subr.mxu0 0.0
          %1927 = vmatpush1.msra.mxu0 %v1912
          %1928 = vmatprep.subr.mxu0 0.0
          %1929 = vmatpush1.msra.mxu0 %v1913
          %1930 = vmatprep.subr.mxu0 0.0
          %1931 = vmatpush1.msra.mxu0 %v1914
          %1932 = vmatprep.subr.mxu0 0.0
          %1933 = vmatpush1.msra.mxu0 %v1915
          %1934 = vmatprep.subr.mxu0 0.0
          %1935 = vmatpush1.msra.mxu0 0.0
          %1936 = vmatprep.subr.mxu0 0.0
          %1937 = vmatpush1.msra.mxu0 0.0
          %1938 = vmatprep.subr.mxu0 0.0
          %1939 = vmatpush1.msra.mxu0 0.0
          %1940 = vmatprep.subr.mxu0 0.0
          %1941 = vmatpush1.msra.mxu0 0.0
          %1942 = vmatprep.subr.mxu0 0.0
          %1943 = vmatpush1.msra.mxu0 0.0
          %1944 = vmatprep.subr.mxu0 0.0
          %1945 = vmatpush1.msra.mxu0 0.0
          %1946 = vmatprep.subr.mxu0 0.0
          %1947 = vmatpush1.msra.mxu0 0.0
          %1948 = vmatprep.subr.mxu0 0.0
          %1949 = vmatpush1.msra.mxu0 0.0
          %1950 = vmatprep.subr.mxu0 0.0
          %1951 = vmatpush1.msra.mxu0 0.0
          %1952 = vmatprep.subr.mxu0 0.0
          %1953 = vmatpush1.msra.mxu0 0.0
          %1954 = vmatprep.subr.mxu0 0.0
          %1955 = vmatpush1.msra.mxu0 0.0
          %1956 = vmatprep.subr.mxu0 0.0
          %1957 = vmatpush1.msra.mxu0 0.0
          %1958 = vmatprep.subr.mxu0 0.0
          %1959 = vmatpush1.msra.mxu0 0.0
          %1960 = vmatprep.subr.mxu0 0.0
          %1961 = vmatpush1.msra.mxu0 0.0
          %1962 = vmatprep.subr.mxu0 0.0
          %1963 = vmatpush1.msra.mxu0 0.0
          %1964 = vmatprep.subr.mxu0 0.0
          %1965 = vmatpush1.msra.mxu0 0.0
          %1966 = vmatprep.subr.mxu0 0.0
          %1967 = vmatpush1.msra.mxu0 0.0
          %1968 = vmatprep.subr.mxu0 0.0
          %1969 = vmatpush1.msra.mxu0 0.0
          %1970 = vmatprep.subr.mxu0 0.0
          %1971 = vmatpush1.msra.mxu0 0.0
          %1972 = vmatprep.subr.mxu0 0.0
          %1973 = vmatpush1.msra.mxu0 0.0
          %1974 = vmatprep.subr.mxu0 0.0
          %1975 = vmatpush1.msra.mxu0 0.0
          %1976 = vmatprep.subr.mxu0 0.0
          %1977 = vmatpush1.msra.mxu0 0.0
          %1978 = vmatprep.subr.mxu0 0.0
          %1979 = vmatpush1.msra.mxu0 0.0
          %1980 = vmatprep.subr.mxu0 0.0
          %1981 = vmatpush1.msra.mxu0 0.0
          %1982 = vmatprep.subr.mxu0 0.0
          %1983 = vmatpush1.msra.mxu0 0.0
          %1984 = vmatprep.subr.mxu0 0.0
          %1985 = vmatpush1.msra.mxu0 0.0
          %1986 = vmatprep.subr.mxu0 0.0
          %1987 = vmatpush1.msra.mxu0 0.0
          %1988 = vmatprep.subr.mxu0 0.0
          %1989 = vmatpush1.msra.mxu0 0.0
          %1990 = vmatprep.mubr.f32.mxu0 0.0
          %1991 = vmatmul.mubr.f32.gmra.mrb[0].mxu0 %v1924
          %v1992 = vpop.f32.mrb[0].mxu0
          %v1993 = vadd.f32 %v1921, %v1992
          %v1994 = vpop.f32.mrb[0].mxu0
          %1995 = vdwg.mxu0
          %1996 = vst [vmem:[%s680] sm:$0xff] %v1993
        $region92: #{tpu_custom_call.1} parent=83 // pred_fallthru
          _
        %s1997 = sand.u32 %s451, 1
        %s1998 = scalar_lea.sflag [#allocation4], %s1997
        %s1999 = sand.u32 %s451, 1
        %s2000 = smul.addr %s1999, 8
        %s2001 = scalar_lea.vmem [#allocation3], %s2000
        // Predicated region
        $region93: #{tpu_custom_call.1} parent=83 // pred_check
          %p2002 = pneg %p461
        $region94: #{tpu_custom_call.1} parent=83 // pred_check_branch
          %2004 = sbr.rel (%p2002) target = $region96
        $region95: #{tpu_custom_call.1} parent=83 // pred_region
          %s2006 = ssub.s32 128, 128
          %2007 = vsyncadd %s1998, %s2006
          %s2008 = smul.addr %s34, 128
          %s2009 = scalar_lea.hbm %s16, %s2008
          %s2011 = sshll.u32 %s2001, 4
          %s2012 = int_to_ptr.vmem [resolvable:$true] %s2011
          %2014 = dma.vmem_to_hbm [thread:$0]  %s2012, 128, %s2009, %s1998
        $region96: #{tpu_custom_call.1} parent=83 // pred_fallthru
          _
      $region84: #{tpu_custom_call.1} parent=5 // pred_fallthru
        _
      %p2015 = scmp.le.s32.totalorder 2, %s25
      // Predicated region
      $region97: #{tpu_custom_call.1} parent=5 // pred_check
        %p2016 = pneg %p2015
      $region98: #{tpu_custom_call.1} parent=5 // pred_check_branch
        %2018 = sbr.rel (%p2016) target = $region100
      $region99: #{tpu_custom_call.1} parent=5 // pred_region
        %s2019 = ssub.s32 %s25, 2
        // Predicated region
        $region101: #{tpu_custom_call.1} parent=99 // pred_check
          %p2020 = pneg %p467
        $region102: #{tpu_custom_call.1} parent=99 // pred_check_branch
          %2022 = sbr.rel (%p2020) target = $region104
        $region103: #{tpu_custom_call.1} parent=99 // pred_region
          %s2023 = sand.u32 %s452, 1
          %s2024 = scalar_lea.sflag [#allocation4], %s2023
          %s2025 = sand.u32 %s452, 1
          %s2026 = smul.addr %s2025, 8
          %s2027 = scalar_lea.vmem [#allocation3], %s2026
          %2028 = dma.done %s2024, 128
        $region104: #{tpu_custom_call.1} parent=99 // pred_fallthru
          _
      $region100: #{tpu_custom_call.1} parent=5 // pred_fallthru
        _
    $region6: #{tpu_custom_call.1} parent=1 // loop_footer
      %s29 = sadd.s32 1, %s25
    $region7: #{tpu_custom_call.1} parent=1 // loop_footer_branch
      %24 = sbr.rel target = $region3
    $region8: #{tpu_custom_call.1} parent=1 // loop_exit
      _
    %2029 = vsyncpa [#allocation4], 1
    %s2030 = scalar_lea.sflag [#allocation4], 1
    %2031 = vsyncpa %s2030, 1

</llo_original>
